<compile_context>
chip_gen: v7x
topology: tpu7x:2x2x1
jax: 0.10.0
libtpu: 0.0.40
codegen_flags: <defaults>
</compile_context>

<pallas_src>
import functools
import math

import jax
import jax.numpy as jnp
from jax import lax
from jax.experimental import pallas as pl
from jax.experimental.pallas import tpu as pltpu


def _seq_attention_kernel(q_ref, k_ref, v_ref, pe_ref, o_ref, *, span, seq_len, scale):
    # Per grid step:
    #   q_ref  : (TM, H)   query tile (global rows i*TM .. i*TM+TM-1)
    #   k_ref  : (K, H)    keys   = [span cached, seq_len current], K = span + seq_len
    #   v_ref  : (K, H)    values
    #   pe_ref : (H, K)    key_pe zero-padded from span -> K columns
    #   o_ref  : (TM, H)
    i = pl.program_id(1)
    tm = q_ref.shape[0]
    K = k_ref.shape[0]

    q = q_ref[...]
    k = k_ref[...]
    v = v_ref[...]

    # Content scores in the absolute key frame, f32 accumulation on the MXU.
    s_cont = lax.dot_general(
        q, k, dimension_numbers=(((1,), (1,)), ((), ())),
        preferred_element_type=jnp.float32)                      # (TM, K)

    # Positional scores in the relative frame (columns >= span are exact zeros).
    p_pos = jnp.dot(q, pe_ref[...], preferred_element_type=jnp.float32)  # (TM, K)

    # Global row (query) index of each tile row.
    row = i * tm + lax.broadcasted_iota(jnp.int32, (tm, 1), 0)   # (TM, 1)

    # _skew: circularly shift row m of the positional scores right by m so that
    # relative column l lands on absolute key column k = m + l.  Implemented as
    # ceil(log2(seq_len)) static lane rotations + per-row selects — no strided
    # gathers, no unaligned concatenates.
    p_skew = p_pos
    shift = 1
    while shift < seq_len:
        rolled = pltpu.roll(p_skew, shift, 1)
        p_skew = jnp.where((row & shift) != 0, rolled, p_skew)
        shift <<= 1

    scores = (s_cont + p_skew) * scale

    # Band mask: query m attends to keys m .. m+span-1 (previous steps only).
    col = lax.broadcasted_iota(jnp.int32, (tm, K), 1)
    rel = col - row
    scores = jnp.where((rel >= 0) & (rel < span), scores, -1e30)

    # Numerically-stable softmax in f32; normalization deferred past the PV matmul.
    m_row = jnp.max(scores, axis=-1, keepdims=True)
    e = jnp.exp(scores - m_row)
    denom = jnp.sum(e, axis=-1, keepdims=True)

    acc = jnp.dot(e.astype(v.dtype), v, preferred_element_type=jnp.float32)  # (TM, H)
    out = acc * pl.reciprocal(denom, approx=True)
    o_ref[...] = out.astype(o_ref.dtype)


def seq_attention(query, key, value, key_pe, *, block_m=None):
    """Pallas TPU forward for SeqAttention (fixed span, dropout = identity)."""
    B, M, H = query.shape
    Bk, K, Hk = key.shape
    assert value.shape == key.shape and Hk == H and Bk == B
    span = K - M                       # attn_span; key/value = [span cached, M current]
    assert span > 0
    assert key_pe.shape == (1, H, span)

    if block_m is None:
        block_m = min(M, 256)
    assert M % block_m == 0, "seq_len must be divisible by block_m"

    # Wrapper-side layout plumbing (one-time, outside the kernel): drop key_pe's
    # batch dim and zero-pad its relative axis span -> K so the in-kernel
    # positional matmul is a plain lane-aligned (H, K) dot with no concat.
    pe = jnp.pad(key_pe[0], ((0, 0), (0, K - span)))

    grid = (B, M // block_m)
    kernel = functools.partial(
        _seq_attention_kernel, span=span, seq_len=M, scale=1.0 / math.sqrt(H))

    itemsize = query.dtype.itemsize
    flops = 6 * B * M * K * H          # QK^T + Q·PE + PV, 2*M*N*K each
    bytes_accessed = (query.size + key.size + value.size + B * M * H) * itemsize \
        + pe.size * pe.dtype.itemsize

    return pl.pallas_call(
        kernel,
        out_shape=jax.ShapeDtypeStruct((B, M, H), query.dtype),
        grid_spec=pltpu.PrefetchScalarGridSpec(
            num_scalar_prefetch=0,
            grid=grid,
            in_specs=[
                pl.BlockSpec((None, block_m, H), lambda b, i: (b, i, 0)),  # query tile
                pl.BlockSpec((None, K, H), lambda b, i: (b, 0, 0)),        # keys (resident)
                pl.BlockSpec((None, K, H), lambda b, i: (b, 0, 0)),        # values (resident)
                pl.BlockSpec((H, K), lambda b, i: (0, 0)),                 # padded key_pe
            ],
            out_specs=pl.BlockSpec((None, block_m, H), lambda b, i: (b, i, 0)),
        ),
        compiler_params=pltpu.CompilerParams(
            dimension_semantics=("parallel", "parallel")),
        cost_estimate=pl.CostEstimate(
            flops=flops, transcendentals=B * M * K, bytes_accessed=bytes_accessed),
    )(query, key, value, pe)


# ------------------------- pure-JAX reference (f32) -------------------------

def _skew_ref(x, pad_value):
    B, M, L = x.shape
    x = jnp.pad(x, ((0, 0), (0, 0), (0, M + 1)), constant_values=pad_value)
    x = x.reshape(B, -1)
    x = x[:, :-M]
    return x.reshape(B, M, M + L)


def _unskew_ref(x):
    B, M, L_tot = x.shape
    L = L_tot - M
    x = x.reshape(B, -1)
    x = jnp.pad(x, ((0, 0), (0, M)))
    x = x.reshape(B, M, M + L + 1)
    return x[:, :, :L]


def seq_attention_reference(query, key, value, key_pe):
    q = query.astype(jnp.float32)
    k = key.astype(jnp.float32)
    v = value.astype(jnp.float32)
    pe = key_pe.astype(jnp.float32)
    H = q.shape[-1]
    attn_cont = jnp.einsum("bmh,bkh->bmk", q, k)
    attn_cont = _unskew_ref(attn_cont)
    attn_pos = jnp.einsum("bmh,hl->bml", q, pe[0])
    attn = (attn_cont + attn_pos) / math.sqrt(H)
    attn = jax.nn.softmax(attn, axis=-1)
    attn = _skew_ref(attn, 0.0)
    return jnp.einsum("bmk,bkh->bmh", attn, v)


if __name__ == "__main__":
    B, M, SPAN, H = 2, 128, 128, 128          # batch, segment len, attn_span, hidden
    K = M + SPAN                              # key/value length = cached span + segment

    root = jax.random.PRNGKey(0)
    kq, kk, kv, kp = jax.random.split(root, 4)
    # bf16 operands (MXU-friendly); the kernel accumulates in f32.
    query = jax.random.normal(kq, (B, M, H), jnp.float32).astype(jnp.bfloat16)
    key = jax.random.normal(kk, (B, K, H), jnp.float32).astype(jnp.bfloat16)
    value = jax.random.normal(kv, (B, K, H), jnp.float32).astype(jnp.bfloat16)
    key_pe = (0.1 * jax.random.normal(kp, (1, H, SPAN), jnp.float32)).astype(jnp.bfloat16)

    out = seq_attention(query, key, value, key_pe)
    out = jax.block_until_ready(out)
    assert out.shape == (B, M, H) and out.dtype == query.dtype

    ref = seq_attention_reference(query, key, value, key_pe)
    out_f32 = out.astype(jnp.float32)
    max_err = jnp.max(jnp.abs(out_f32 - ref))
    assert jnp.allclose(out_f32, ref, atol=3e-2, rtol=3e-2), f"max abs err {max_err}"
    print("KERNEL_OK")
</pallas_src>

<mosaic_0001>
module attributes {stable_mosaic.version = 11 : i64} {
  func.func @_seq_attention_kernel(%arg0: i32, %arg1: i32, %arg2: memref<1x128x128xbf16, #tpu.memory_space<vmem>>, %arg3: memref<1x256x128xbf16, #tpu.memory_space<vmem>>, %arg4: memref<1x256x128xbf16, #tpu.memory_space<vmem>>, %arg5: memref<128x256xbf16, #tpu.memory_space<vmem>>, %arg6: memref<1x128x128xbf16, #tpu.memory_space<vmem>>) attributes {dimension_semantics = [#tpu.dimension_semantics<parallel>, #tpu.dimension_semantics<parallel>], iteration_bounds = array<i64: 2, 1>, scalar_prefetch = 0 : i64, scratch_operands = 0 : i64, tpu.core_type = #tpu.core_type<tc>, window_params = [{transform_indices = @transform_0, window_bounds = array<i64: 1, 128, 128>}, {transform_indices = @transform_1, window_bounds = array<i64: 1, 256, 128>}, {transform_indices = @transform_2, window_bounds = array<i64: 1, 256, 128>}, {pipeline_mode = #tpu.pipeline_mode<synchronous>, transform_indices = @transform_3, window_bounds = array<i64: 128, 256>}, {transform_indices = @transform_4, window_bounds = array<i64: 1, 128, 128>}]} {
    %c0 = arith.constant 0 : index
    %c0_0 = arith.constant 0 : index
    %c0_1 = arith.constant 0 : index
    %0 = vector.load %arg2[%c0, %c0_0, %c0_1] : memref<1x128x128xbf16, #tpu.memory_space<vmem>>, vector<1x128x128xbf16>
    %1 = vector.shape_cast %0 : vector<1x128x128xbf16> to vector<128x128xbf16>
    %c0_2 = arith.constant 0 : index
    %c0_3 = arith.constant 0 : index
    %c0_4 = arith.constant 0 : index
    %2 = vector.load %arg3[%c0_2, %c0_3, %c0_4] : memref<1x256x128xbf16, #tpu.memory_space<vmem>>, vector<1x256x128xbf16>
    %3 = vector.shape_cast %2 : vector<1x256x128xbf16> to vector<256x128xbf16>
    %c0_5 = arith.constant 0 : index
    %c0_6 = arith.constant 0 : index
    %c0_7 = arith.constant 0 : index
    %4 = vector.load %arg4[%c0_5, %c0_6, %c0_7] : memref<1x256x128xbf16, #tpu.memory_space<vmem>>, vector<1x256x128xbf16>
    %5 = vector.shape_cast %4 : vector<1x256x128xbf16> to vector<256x128xbf16>
    %cst = arith.constant dense<0.000000e+00> : vector<128x256xf32>
    %6 = tpu.matmul %1, %3, %cst {dimension_numbers = #tpu.dot_dimension_numbers<[1], [1], [0], [0], [0, 0, 1, 0], [], []>} : vector<128x128xbf16>, vector<256x128xbf16>, vector<128x256xf32> -> vector<128x256xf32>
    %c0_8 = arith.constant 0 : index
    %c0_9 = arith.constant 0 : index
    %7 = vector.load %arg5[%c0_8, %c0_9] : memref<128x256xbf16, #tpu.memory_space<vmem>>, vector<128x256xbf16>
    %cst_10 = arith.constant dense<0.000000e+00> : vector<128x256xf32>
    %8 = tpu.matmul %1, %7, %cst_10 {dimension_numbers = #tpu.dot_dimension_numbers<[1], [0], [0], [1], [0, 0, 1, 1], [], []>} : vector<128x128xbf16>, vector<128x256xbf16>, vector<128x256xf32> -> vector<128x256xf32>
    %c128_i32 = arith.constant 128 : i32
    %9 = arith.muli %arg1, %c128_i32 : i32
    %10 = tpu.iota {dimensions = array<i32: 0>} : vector<128x1xi32>
    %11 = vector.broadcast %9 : i32 to vector<128x1xi32>
    %12 = arith.addi %11, %10 : vector<128x1xi32>
    %c1_i32 = arith.constant 1 : i32
    %13 = tpu.dynamic_rotate %8 by %c1_i32 dim 1 : vector<128x256xf32>, i32 -> vector<128x256xf32>
    %c1_i32_11 = arith.constant 1 : i32
    %14 = vector.broadcast %c1_i32_11 : i32 to vector<128x1xi32>
    %15 = arith.andi %12, %14 : vector<128x1xi32>
    %c0_i32 = arith.constant 0 : i32
    %16 = vector.broadcast %c0_i32 : i32 to vector<128x1xi32>
    %17 = arith.cmpi ne, %15, %16 : vector<128x1xi32>
    %18 = vector.shape_cast %17 : vector<128x1xi1> to vector<128x1xi1>
    %19 = vector.broadcast %18 : vector<128x1xi1> to vector<128x256xi1>
    %20 = arith.select %19, %13, %8 : vector<128x256xi1>, vector<128x256xf32>
    %c2_i32 = arith.constant 2 : i32
    %21 = tpu.dynamic_rotate %20 by %c2_i32 dim 1 : vector<128x256xf32>, i32 -> vector<128x256xf32>
    %c2_i32_12 = arith.constant 2 : i32
    %22 = vector.broadcast %c2_i32_12 : i32 to vector<128x1xi32>
    %23 = arith.andi %12, %22 : vector<128x1xi32>
    %c0_i32_13 = arith.constant 0 : i32
    %24 = vector.broadcast %c0_i32_13 : i32 to vector<128x1xi32>
    %25 = arith.cmpi ne, %23, %24 : vector<128x1xi32>
    %26 = vector.shape_cast %25 : vector<128x1xi1> to vector<128x1xi1>
    %27 = vector.broadcast %26 : vector<128x1xi1> to vector<128x256xi1>
    %28 = arith.select %27, %21, %20 : vector<128x256xi1>, vector<128x256xf32>
    %c4_i32 = arith.constant 4 : i32
    %29 = tpu.dynamic_rotate %28 by %c4_i32 dim 1 : vector<128x256xf32>, i32 -> vector<128x256xf32>
    %c4_i32_14 = arith.constant 4 : i32
    %30 = vector.broadcast %c4_i32_14 : i32 to vector<128x1xi32>
    %31 = arith.andi %12, %30 : vector<128x1xi32>
    %c0_i32_15 = arith.constant 0 : i32
    %32 = vector.broadcast %c0_i32_15 : i32 to vector<128x1xi32>
    %33 = arith.cmpi ne, %31, %32 : vector<128x1xi32>
    %34 = vector.shape_cast %33 : vector<128x1xi1> to vector<128x1xi1>
    %35 = vector.broadcast %34 : vector<128x1xi1> to vector<128x256xi1>
    %36 = arith.select %35, %29, %28 : vector<128x256xi1>, vector<128x256xf32>
    %c8_i32 = arith.constant 8 : i32
    %37 = tpu.dynamic_rotate %36 by %c8_i32 dim 1 : vector<128x256xf32>, i32 -> vector<128x256xf32>
    %c8_i32_16 = arith.constant 8 : i32
    %38 = vector.broadcast %c8_i32_16 : i32 to vector<128x1xi32>
    %39 = arith.andi %12, %38 : vector<128x1xi32>
    %c0_i32_17 = arith.constant 0 : i32
    %40 = vector.broadcast %c0_i32_17 : i32 to vector<128x1xi32>
    %41 = arith.cmpi ne, %39, %40 : vector<128x1xi32>
    %42 = vector.shape_cast %41 : vector<128x1xi1> to vector<128x1xi1>
    %43 = vector.broadcast %42 : vector<128x1xi1> to vector<128x256xi1>
    %44 = arith.select %43, %37, %36 : vector<128x256xi1>, vector<128x256xf32>
    %c16_i32 = arith.constant 16 : i32
    %45 = tpu.dynamic_rotate %44 by %c16_i32 dim 1 : vector<128x256xf32>, i32 -> vector<128x256xf32>
    %c16_i32_18 = arith.constant 16 : i32
    %46 = vector.broadcast %c16_i32_18 : i32 to vector<128x1xi32>
    %47 = arith.andi %12, %46 : vector<128x1xi32>
    %c0_i32_19 = arith.constant 0 : i32
    %48 = vector.broadcast %c0_i32_19 : i32 to vector<128x1xi32>
    %49 = arith.cmpi ne, %47, %48 : vector<128x1xi32>
    %50 = vector.shape_cast %49 : vector<128x1xi1> to vector<128x1xi1>
    %51 = vector.broadcast %50 : vector<128x1xi1> to vector<128x256xi1>
    %52 = arith.select %51, %45, %44 : vector<128x256xi1>, vector<128x256xf32>
    %c32_i32 = arith.constant 32 : i32
    %53 = tpu.dynamic_rotate %52 by %c32_i32 dim 1 : vector<128x256xf32>, i32 -> vector<128x256xf32>
    %c32_i32_20 = arith.constant 32 : i32
    %54 = vector.broadcast %c32_i32_20 : i32 to vector<128x1xi32>
    %55 = arith.andi %12, %54 : vector<128x1xi32>
    %c0_i32_21 = arith.constant 0 : i32
    %56 = vector.broadcast %c0_i32_21 : i32 to vector<128x1xi32>
    %57 = arith.cmpi ne, %55, %56 : vector<128x1xi32>
    %58 = vector.shape_cast %57 : vector<128x1xi1> to vector<128x1xi1>
    %59 = vector.broadcast %58 : vector<128x1xi1> to vector<128x256xi1>
    %60 = arith.select %59, %53, %52 : vector<128x256xi1>, vector<128x256xf32>
    %c64_i32 = arith.constant 64 : i32
    %61 = tpu.dynamic_rotate %60 by %c64_i32 dim 1 : vector<128x256xf32>, i32 -> vector<128x256xf32>
    %c64_i32_22 = arith.constant 64 : i32
    %62 = vector.broadcast %c64_i32_22 : i32 to vector<128x1xi32>
    %63 = arith.andi %12, %62 : vector<128x1xi32>
    %c0_i32_23 = arith.constant 0 : i32
    %64 = vector.broadcast %c0_i32_23 : i32 to vector<128x1xi32>
    %65 = arith.cmpi ne, %63, %64 : vector<128x1xi32>
    %66 = vector.shape_cast %65 : vector<128x1xi1> to vector<128x1xi1>
    %67 = vector.broadcast %66 : vector<128x1xi1> to vector<128x256xi1>
    %68 = arith.select %67, %61, %60 : vector<128x256xi1>, vector<128x256xf32>
    %69 = arith.addf %6, %68 : vector<128x256xf32>
    %cst_24 = arith.constant 0.0883883461 : f32
    %70 = vector.broadcast %cst_24 : f32 to vector<128x256xf32>
    %71 = arith.mulf %69, %70 : vector<128x256xf32>
    %72 = tpu.iota {dimensions = array<i32: 1>} : vector<128x256xi32>
    %73 = vector.broadcast %12 : vector<128x1xi32> to vector<128x256xi32>
    %74 = arith.subi %72, %73 : vector<128x256xi32>
    %c0_i32_25 = arith.constant 0 : i32
    %75 = vector.broadcast %c0_i32_25 : i32 to vector<128x256xi32>
    %76 = arith.cmpi sge, %74, %75 : vector<128x256xi32>
    %c128_i32_26 = arith.constant 128 : i32
    %77 = vector.broadcast %c128_i32_26 : i32 to vector<128x256xi32>
    %78 = arith.cmpi slt, %74, %77 : vector<128x256xi32>
    %79 = arith.andi %76, %78 : vector<128x256xi1>
    %cst_27 = arith.constant -1.000000e+30 : f32
    %80 = vector.broadcast %cst_27 : f32 to vector<128x256xf32>
    %81 = arith.select %79, %71, %80 : vector<128x256xi1>, vector<128x256xf32>
    %cst_28 = arith.constant dense<0xFF800000> : vector<128xf32>
    %82 = vector.multi_reduction <maximumf>, %81, %cst_28 [1] : vector<128x256xf32> to vector<128xf32>
    %83 = vector.shape_cast %82 : vector<128xf32> to vector<128x1xf32>
    %84 = vector.broadcast %83 : vector<128x1xf32> to vector<128x256xf32>
    %85 = arith.subf %81, %84 : vector<128x256xf32>
    %86 = math.exp %85 : vector<128x256xf32>
    %cst_29 = arith.constant dense<0.000000e+00> : vector<128xf32>
    %87 = vector.multi_reduction <add>, %86, %cst_29 [1] : vector<128x256xf32> to vector<128xf32>
    %88 = vector.shape_cast %87 : vector<128xf32> to vector<128x1xf32>
    %89 = arith.truncf %86 : vector<128x256xf32> to vector<128x256xbf16>
    %cst_30 = arith.constant dense<0.000000e+00> : vector<128x128xf32>
    %90 = tpu.matmul %89, %5, %cst_30 {dimension_numbers = #tpu.dot_dimension_numbers<[1], [0], [0], [1], [0, 0, 1, 1], [], []>} : vector<128x256xbf16>, vector<256x128xbf16>, vector<128x128xf32> -> vector<128x128xf32>
    %91 = tpu.reciprocal %88 {approx = true} : vector<128x1xf32> -> vector<128x1xf32>
    %92 = vector.broadcast %91 : vector<128x1xf32> to vector<128x128xf32>
    %93 = arith.mulf %90, %92 : vector<128x128xf32>
    %94 = arith.truncf %93 : vector<128x128xf32> to vector<128x128xbf16>
    %c0_31 = arith.constant 0 : index
    %c0_32 = arith.constant 0 : index
    %c0_33 = arith.constant 0 : index
    %95 = vector.load %arg6[%c0_31, %c0_32, %c0_33] : memref<1x128x128xbf16, #tpu.memory_space<vmem>>, vector<1x128x128xbf16>
    %96 = vector.shape_cast %95 : vector<1x128x128xbf16> to vector<128x128xbf16>
    %97 = vector.shape_cast %94 : vector<128x128xbf16> to vector<1x128x128xbf16>
    tpu.vector_store %arg6[%c0_31, %c0_32, %c0_33], %97 {strides = array<i32>} : memref<1x128x128xbf16, #tpu.memory_space<vmem>>, vector<1x128x128xbf16>,
    return
  }
  func.func @transform_0(%arg0: i32, %arg1: i32) -> (i32, i32, i32) {
    %c0_i32 = arith.constant 0 : i32
    %c0_i32_0 = arith.constant 0 : i32
    return %arg0, %arg1, %c0_i32 : i32, i32, i32
  }
  func.func @transform_1(%arg0: i32, %arg1: i32) -> (i32, i32, i32) {
    %c0_i32 = arith.constant 0 : i32
    %c0_i32_0 = arith.constant 0 : i32
    %c0_i32_1 = arith.constant 0 : i32
    return %arg0, %c0_i32, %c0_i32_0 : i32, i32, i32
  }
  func.func @transform_2(%arg0: i32, %arg1: i32) -> (i32, i32, i32) {
    %c0_i32 = arith.constant 0 : i32
    %c0_i32_0 = arith.constant 0 : i32
    %c0_i32_1 = arith.constant 0 : i32
    return %arg0, %c0_i32, %c0_i32_0 : i32, i32, i32
  }
  func.func @transform_3(%arg0: i32, %arg1: i32) -> (i32, i32) {
    %c0_i32 = arith.constant 0 : i32
    %c0_i32_0 = arith.constant 0 : i32
    %c0_i32_1 = arith.constant 0 : i32
    return %c0_i32, %c0_i32_0 : i32, i32
  }
  func.func @transform_4(%arg0: i32, %arg1: i32) -> (i32, i32, i32) {
    %c0_i32 = arith.constant 0 : i32
    %c0_i32_0 = arith.constant 0 : i32
    return %arg0, %arg1, %c0_i32 : i32, i32, i32
  }
}

</mosaic_0001>

<llo_original>
// kernel: tpu_custom_call.1
$region0: #{tpu_custom_call.1}
  #allocation0 [shape = 'u32[]', space=smem, size = 0x4, offset = 0x4, fixed_abs, tag = 'smem constant byte address 0x4 - core index']
  #allocation1 [shape = 'u32[144,128]{1,0:T(1,128)}', space=vmem, size = 0x12000, scoped, tag = 'internal scratch']
  %s0 = inlined_call_operand.hbm [shape: bf16[2,128,128], index: 0, kind: input, shape index: {}]
  %s1 = inlined_call_operand.hbm [shape: bf16[2,256,128], index: 1, kind: input, shape index: {}]
  %s2 = inlined_call_operand.hbm [shape: bf16[2,256,128], index: 2, kind: input, shape index: {}]
  %s3 = inlined_call_operand.hbm [shape: bf16[128,256], index: 3, kind: input, shape index: {}]
  %s4 = inlined_call_operand.hbm [shape: bf16[2,128,128], index: 4, kind: output, shape index: {}]
  %s5 = sld [smem:[#allocation0]]
  $region65: #{tpu_custom_call.1} parent=0
    _
  %s7 = ssub.s32 1, %s5
  %s8 = scalar_select 0, %s7, %s5
  $region1: #{tpu_custom_call.1} parent=0
    #allocation2 [shape = 'u8[65536]{0}', space=vmem, size = 0x10000, scoped, tag = 'input window, operand 0']
    #allocation3 [shape = 's32[2]{0}', space=sflag, size = 0x8, scoped, tag = 'scoped memory for tpu_custom_call.1']
    #allocation4 [shape = 's32[2]{0}', space=sflag, size = 0x8, scoped, tag = 'scoped memory for tpu_custom_call.1']
    #allocation5 [shape = 'u8[131072]{0}', space=vmem, size = 0x20000, scoped, tag = 'input window, operand 1']
    #allocation6 [shape = 's32[2]{0}', space=sflag, size = 0x8, scoped, tag = 'scoped memory for tpu_custom_call.1']
    #allocation7 [shape = 'u8[131072]{0}', space=vmem, size = 0x20000, scoped, tag = 'input window, operand 2']
    #allocation8 [shape = 'u8[65536]{0}', space=vmem, size = 0x10000, scoped, tag = 'input window, operand 3, single buffered']
    #allocation9 [shape = 's32[1]{0}', space=sflag, size = 0x4, scoped, tag = 'scoped memory for tpu_custom_call.1']
    #allocation10 [shape = 'u8[65536]{0}', space=vmem, size = 0x10000, scoped, tag = 'output window, operand 0']
    %9 = vsyncpa [#allocation3], 0
    %s10 = scalar_lea.sflag [#allocation3], 1
    %11 = vsyncpa %s10, 0
    %12 = vsyncpa [#allocation6], 0
    %s13 = scalar_lea.sflag [#allocation6], 1
    %14 = vsyncpa %s13, 0
    %15 = vsyncpa [#allocation9], 0
    %16 = vsyncpa [#allocation4], 0
    %s17 = scalar_lea.sflag [#allocation4], 1
    %18 = vsyncpa %s17, 0
    loop: start=0, step=1, limit=4
    $region2: #{tpu_custom_call.1} parent=1 // loop_pre_header
      _
    $region3: #{tpu_custom_call.1} parent=1 // loop_header
      %s20 = sphi 0, %s24
      %p21 = scmp.ge.s32.totalorder %s20, 4
      %s27 = sphi 0, %s39
      %s28 = sphi 0, %s35
      %s29 = sphi 0, %s27
      %s30 = sphi 0, %s28
      %s31 = sphi 0, %s29
      %s32 = sphi 0, %s30
      %s44 = sphi 0, %s46
      %s47 = sphi 0, %s44
      %s48 = sphi 0, %s47
      %s64 = sphi 0, %s48
      %s70 = sphi 0, %s72
      %s73 = sphi 0, %s70
      %s74 = sphi 0, %s73
      %s90 = sphi 0, %s74
      %s96 = sphi 0, %s98
      %s99 = sphi 0, %s96
      %s100 = sphi 0, %s99
      %s116 = sphi 0, %s100
      %s120 = sphi 0, %s120
      %s122 = sphi 0, %s120
      %s123 = sphi 0, %s122
      %s137 = sphi 0, %s123
      %s145 = sphi 0, %s147
      %s148 = sphi 0, %s145
      %s149 = sphi 0, %s148
      %s165 = sphi 0, %s149
    $region4: #{tpu_custom_call.1} parent=1 // loop_header_branch
      %23 = sbr.rel (%p21) target = $region8
    $region5: #{tpu_custom_call.1} parent=1 // loop_body
      %s25 = ssub.s32 %s20, 1
      %s26 = ssub.s32 %s20, 2
      %s33 = sadd.s32 1, %s28
      %p34 = scmp.ge.s32.totalorder %s33, 1
      %s35 = scalar_select %p34, 0, %s33
      %s36 = sadd.s32 1, %s27
      %s37 = scalar_select %p34, %s36, %s27
      %p38 = scmp.ge.s32.totalorder %s37, 2
      %s39 = scalar_select %p38, 0, %s37
      %s40 = ssub.s32 %s27, %s39
      %s41 = ssub.s32 %s28, %s35
      %s42 = sor.u32 %s40, %s41
      %p43 = scmp.eq.s32.totalorder %s42, 0
      %s45 = sadd.s32 %s44, 1
      %s46 = scalar_select %p43, %s44, %s45
      %p49 = pneg %p43
      %p50 = scmp.eq.s32.totalorder %s20, 1
      %p51 = por %p49, %p50
      %p52 = scmp.ne.s32.totalorder %s44, %s47
      %p53 = scmp.eq.s32.totalorder %s20, 0
      %p54 = por %p52, %p53
      %p55 = scmp.ne.s32.totalorder %s44, %s47
      %p56 = scmp.eq.s32.totalorder %s25, 1
      %p57 = por %p55, %p56
      %p58 = scmp.ne.s32.totalorder %s47, %s48
      %p59 = scmp.eq.s32.totalorder %s25, 0
      %p60 = por %p58, %p59
      %p61 = scmp.ne.s32.totalorder %s47, %s48
      %p62 = scmp.eq.s32.totalorder %s26, 1
      %p63 = por %p61, %p62
      %p65 = scmp.ne.s32.totalorder %s48, %s64
      %p66 = scmp.eq.s32.totalorder %s26, 0
      %p67 = por %p65, %p66
      %s68 = ssub.s32 %s27, %s39
      %p69 = scmp.eq.s32.totalorder %s68, 0
      %s71 = sadd.s32 %s70, 1
      %s72 = scalar_select %p69, %s70, %s71
      %p75 = pneg %p69
      %p76 = scmp.eq.s32.totalorder %s20, 1
      %p77 = por %p75, %p76
      %p78 = scmp.ne.s32.totalorder %s70, %s73
      %p79 = scmp.eq.s32.totalorder %s20, 0
      %p80 = por %p78, %p79
      %p81 = scmp.ne.s32.totalorder %s70, %s73
      %p82 = scmp.eq.s32.totalorder %s25, 1
      %p83 = por %p81, %p82
      %p84 = scmp.ne.s32.totalorder %s73, %s74
      %p85 = scmp.eq.s32.totalorder %s25, 0
      %p86 = por %p84, %p85
      %p87 = scmp.ne.s32.totalorder %s73, %s74
      %p88 = scmp.eq.s32.totalorder %s26, 1
      %p89 = por %p87, %p88
      %p91 = scmp.ne.s32.totalorder %s74, %s90
      %p92 = scmp.eq.s32.totalorder %s26, 0
      %p93 = por %p91, %p92
      %s94 = ssub.s32 %s27, %s39
      %p95 = scmp.eq.s32.totalorder %s94, 0
      %s97 = sadd.s32 %s96, 1
      %s98 = scalar_select %p95, %s96, %s97
      %p101 = pneg %p95
      %p102 = scmp.eq.s32.totalorder %s20, 1
      %p103 = por %p101, %p102
      %p104 = scmp.ne.s32.totalorder %s96, %s99
      %p105 = scmp.eq.s32.totalorder %s20, 0
      %p106 = por %p104, %p105
      %p107 = scmp.ne.s32.totalorder %s96, %s99
      %p108 = scmp.eq.s32.totalorder %s25, 1
      %p109 = por %p107, %p108
      %p110 = scmp.ne.s32.totalorder %s99, %s100
      %p111 = scmp.eq.s32.totalorder %s25, 0
      %p112 = por %p110, %p111
      %p113 = scmp.ne.s32.totalorder %s99, %s100
      %p114 = scmp.eq.s32.totalorder %s26, 1
      %p115 = por %p113, %p114
      %p117 = scmp.ne.s32.totalorder %s100, %s116
      %p118 = scmp.eq.s32.totalorder %s26, 0
      %p119 = por %p117, %p118
      %s121 = sadd.s32 %s120, 1
      %p124 = scmp.eq.s32.totalorder %s20, 1
      %p125 = scmp.ne.s32.totalorder %s120, %s122
      %p126 = scmp.eq.s32.totalorder %s20, 0
      %p127 = por %p125, %p126
      %p128 = scmp.ne.s32.totalorder %s120, %s122
      %p129 = scmp.eq.s32.totalorder %s25, 1
      %p130 = por %p128, %p129
      %p131 = scmp.ne.s32.totalorder %s122, %s123
      %p132 = scmp.eq.s32.totalorder %s25, 0
      %p133 = por %p131, %p132
      %p134 = scmp.ne.s32.totalorder %s122, %s123
      %p135 = scmp.eq.s32.totalorder %s26, 1
      %p136 = por %p134, %p135
      %p138 = scmp.ne.s32.totalorder %s123, %s137
      %p139 = scmp.eq.s32.totalorder %s26, 0
      %p140 = por %p138, %p139
      %s141 = ssub.s32 %s27, %s39
      %s142 = ssub.s32 %s28, %s35
      %s143 = sor.u32 %s141, %s142
      %p144 = scmp.eq.s32.totalorder %s143, 0
      %s146 = sadd.s32 %s145, 1
      %s147 = scalar_select %p144, %s145, %s146
      %p150 = pneg %p144
      %p151 = scmp.eq.s32.totalorder %s20, 1
      %p152 = por %p150, %p151
      %p153 = scmp.ne.s32.totalorder %s145, %s148
      %p154 = scmp.eq.s32.totalorder %s20, 0
      %p155 = por %p153, %p154
      %p156 = scmp.ne.s32.totalorder %s145, %s148
      %p157 = scmp.eq.s32.totalorder %s25, 1
      %p158 = por %p156, %p157
      %p159 = scmp.ne.s32.totalorder %s148, %s149
      %p160 = scmp.eq.s32.totalorder %s25, 0
      %p161 = por %p159, %p160
      %p162 = scmp.ne.s32.totalorder %s148, %s149
      %p163 = scmp.eq.s32.totalorder %s26, 1
      %p164 = por %p162, %p163
      %p166 = scmp.ne.s32.totalorder %s149, %s165
      %p167 = scmp.eq.s32.totalorder %s26, 0
      %p168 = por %p166, %p167
      %p169 = scmp.le.s32.totalorder 1, %s20
      %p170 = scmp.lt.s32.totalorder %s20, 3
      %p171 = pnand %p169, %p170
      %p172 = pneg %p171
      // Predicated region
      $region9: #{tpu_custom_call.1} parent=5 // pred_check
        _
      $region10: #{tpu_custom_call.1} parent=5 // pred_check_branch
        %174 = sbr.rel (%p171) target = $region12
      $region11: #{tpu_custom_call.1} parent=5 // pred_region
        %s175 = ssub.s32 %s20, 1
        // Predicated region
        $region13: #{tpu_custom_call.1} parent=11 // pred_check
          %p176 = pneg %p133
        $region14: #{tpu_custom_call.1} parent=11 // pred_check_branch
          %178 = sbr.rel (%p176) target = $region16
        $region15: #{tpu_custom_call.1} parent=11 // pred_region
          %s180 = ssub.s32 2048, 2048
          %181 = vsyncadd [#allocation9], %s180
          %s182 = sshll.u32 [#allocation8], 4
          %s183 = int_to_ptr.vmem [resolvable:$true] %s182
          %188 = dma.hbm_to_vmem [thread:$0]  %s3, 2048, %s183, [#allocation9], 128, 128, 8
        $region16: #{tpu_custom_call.1} parent=11 // pred_fallthru
          _
      $region12: #{tpu_custom_call.1} parent=5 // pred_fallthru
        _
      %p189 = scmp.lt.s32.totalorder %s20, 2
      // Predicated region
      $region17: #{tpu_custom_call.1} parent=5 // pred_check
        %p190 = pneg %p189
      $region18: #{tpu_custom_call.1} parent=5 // pred_check_branch
        %192 = sbr.rel (%p190) target = $region20
      $region19: #{tpu_custom_call.1} parent=5 // pred_region
        // Predicated region
        $region21: #{tpu_custom_call.1} parent=19 // pred_check
          %p193 = pneg %p54
        $region22: #{tpu_custom_call.1} parent=19 // pred_check_branch
          %195 = sbr.rel (%p193) target = $region24
        $region23: #{tpu_custom_call.1} parent=19 // pred_region
          %s196 = sand.u32 %s44, 1
          %s197 = scalar_lea.sflag [#allocation3], %s196
          %s198 = sand.u32 %s44, 1
          %s199 = smul.addr %s198, 64
          %s200 = scalar_lea.vmem [#allocation2], %s199
          %s201 = smul.u32 16, %s28
          %s203 = ssub.s32 1024, 1024
          %204 = vsyncadd %s197, %s203
          %s205 = smul.addr %s27, 16
          %s206 = sadd.s32 %s201, %s205
          %s207 = smul.addr %s206, 64
          %s208 = scalar_lea.hbm %s0, %s207
          %s209 = sshll.u32 %s200, 4
          %s210 = int_to_ptr.vmem [resolvable:$true] %s209
          %215 = dma.hbm_to_vmem [thread:$0]  %s208, 1024, %s210, %s197, 64, 64, 4
        $region24: #{tpu_custom_call.1} parent=19 // pred_fallthru
          _
        // Predicated region
        $region25: #{tpu_custom_call.1} parent=19 // pred_check
          %p216 = pneg %p80
        $region26: #{tpu_custom_call.1} parent=19 // pred_check_branch
          %218 = sbr.rel (%p216) target = $region28
        $region27: #{tpu_custom_call.1} parent=19 // pred_region
          %s219 = sand.u32 %s20, 1
          %s220 = scalar_lea.sflag [#allocation6], %s219
          %s221 = sand.u32 %s70, 1
          %s222 = smul.addr %s221, 128
          %s223 = scalar_lea.vmem [#allocation5], %s222
          %s225 = ssub.s32 2048, 2048
          %226 = vsyncadd %s220, %s225
          %s227 = smul.addr %s27, 32
          %s228 = smul.addr %s227, 64
          %s229 = scalar_lea.hbm %s1, %s228
          %s230 = sshll.u32 %s223, 4
          %s231 = int_to_ptr.vmem [resolvable:$true] %s230
          %236 = dma.hbm_to_vmem [thread:$0]  %s229, 2048, %s231, %s220, 64, 64, 4
        $region28: #{tpu_custom_call.1} parent=19 // pred_fallthru
          _
        // Predicated region
        $region29: #{tpu_custom_call.1} parent=19 // pred_check
          %p237 = pneg %p106
        $region30: #{tpu_custom_call.1} parent=19 // pred_check_branch
          %239 = sbr.rel (%p237) target = $region32
        $region31: #{tpu_custom_call.1} parent=19 // pred_region
          %s240 = sand.u32 %s20, 1
          %s241 = scalar_lea.sflag [#allocation6], %s240
          %s242 = sand.u32 %s96, 1
          %s243 = smul.addr %s242, 128
          %s244 = scalar_lea.vmem [#allocation7], %s243
          %s246 = ssub.s32 2048, 2048
          %247 = vsyncadd %s241, %s246
          %s248 = smul.addr %s27, 32
          %s249 = smul.addr %s248, 64
          %s250 = scalar_lea.hbm %s2, %s249
          %s251 = sshll.u32 %s244, 4
          %s252 = int_to_ptr.vmem [resolvable:$true] %s251
          %257 = dma.hbm_to_vmem [thread:$0]  %s250, 2048, %s252, %s241, 64, 64, 4
        $region32: #{tpu_custom_call.1} parent=19 // pred_fallthru
          _
      $region20: #{tpu_custom_call.1} parent=5 // pred_fallthru
        _
      %p258 = scmp.le.s32.totalorder 1, %s20
      %p259 = scmp.lt.s32.totalorder %s20, 3
      %p260 = pnand %p258, %p259
      %p261 = pneg %p260
      // Predicated region
      $region33: #{tpu_custom_call.1} parent=5 // pred_check
        _
      $region34: #{tpu_custom_call.1} parent=5 // pred_check_branch
        %263 = sbr.rel (%p260) target = $region36
      $region35: #{tpu_custom_call.1} parent=5 // pred_region
        %s264 = ssub.s32 %s20, 1
        %s265 = sand.u32 %s47, 1
        %s266 = scalar_lea.sflag [#allocation3], %s265
        %s267 = sand.u32 %s47, 1
        %s268 = smul.addr %s267, 64
        %s269 = scalar_lea.vmem [#allocation2], %s268
        // Predicated region
        $region37: #{tpu_custom_call.1} parent=35 // pred_check
          %p270 = pneg %p60
        $region38: #{tpu_custom_call.1} parent=35 // pred_check_branch
          %272 = sbr.rel (%p270) target = $region40
        $region39: #{tpu_custom_call.1} parent=35 // pred_region
          %273 = dma.done %s266, 1024
        $region40: #{tpu_custom_call.1} parent=35 // pred_fallthru
          _
        %s274 = sand.u32 %s25, 1
        %s275 = scalar_lea.sflag [#allocation6], %s274
        %s276 = sand.u32 %s73, 1
        %s277 = smul.addr %s276, 128
        %s278 = scalar_lea.vmem [#allocation5], %s277
        // Predicated region
        $region41: #{tpu_custom_call.1} parent=35 // pred_check
          %p279 = pneg %p86
        $region42: #{tpu_custom_call.1} parent=35 // pred_check_branch
          %281 = sbr.rel (%p279) target = $region44
        $region43: #{tpu_custom_call.1} parent=35 // pred_region
          %282 = dma.done %s275, 2048
        $region44: #{tpu_custom_call.1} parent=35 // pred_fallthru
          _
        %s283 = sand.u32 %s25, 1
        %s284 = scalar_lea.sflag [#allocation6], %s283
        %s285 = sand.u32 %s99, 1
        %s286 = smul.addr %s285, 128
        %s287 = scalar_lea.vmem [#allocation7], %s286
        // Predicated region
        $region45: #{tpu_custom_call.1} parent=35 // pred_check
          %p288 = pneg %p112
        $region46: #{tpu_custom_call.1} parent=35 // pred_check_branch
          %290 = sbr.rel (%p288) target = $region48
        $region47: #{tpu_custom_call.1} parent=35 // pred_region
          %291 = dma.done %s284, 2048
        $region48: #{tpu_custom_call.1} parent=35 // pred_fallthru
          _
        // Predicated region
        $region49: #{tpu_custom_call.1} parent=35 // pred_check
          %p292 = pneg %p133
        $region50: #{tpu_custom_call.1} parent=35 // pred_check_branch
          %294 = sbr.rel (%p292) target = $region52
        $region51: #{tpu_custom_call.1} parent=35 // pred_region
          %295 = dma.done [#allocation9], 2048
        $region52: #{tpu_custom_call.1} parent=35 // pred_fallthru
          _
        %s296 = sand.u32 %s47, 1
        %s297 = scalar_lea.sflag [#allocation3], %s296
        %s298 = sand.u32 %s47, 1
        %s299 = smul.addr %s298, 64
        %s300 = scalar_lea.vmem [#allocation2], %s299
        %p301 = pneg %p60
        %p302 = pneg %p57
        %s303 = sand.u32 %s25, 1
        %s304 = scalar_lea.sflag [#allocation6], %s303
        %s305 = sand.u32 %s73, 1
        %s306 = smul.addr %s305, 128
        %s307 = scalar_lea.vmem [#allocation5], %s306
        %p308 = pneg %p86
        %p309 = pneg %p83
        %s310 = sand.u32 %s25, 1
        %s311 = scalar_lea.sflag [#allocation6], %s310
        %s312 = sand.u32 %s99, 1
        %s313 = smul.addr %s312, 128
        %s314 = scalar_lea.vmem [#allocation7], %s313
        %p315 = pneg %p112
        %p316 = pneg %p109
        %p317 = pneg %p133
        %p318 = pneg %p130
        %p319 = pneg %p161
        %p320 = pneg %p158
        %s321 = sand.u32 %s148, 1
        %s322 = scalar_lea.sflag [#allocation4], %s321
        %s323 = sand.u32 %s148, 1
        %s324 = smul.addr %s323, 64
        %s325 = scalar_lea.vmem [#allocation10], %s324
        %s326 = smul.u32 16, %s30
        %s327 = smul.u32 16, %s30
        %v329 = vld [vmem:[%s269] sm:$0xf]
        %v330 = vld [vmem:[%s269 + $0x4] sm:$0xf]
        %v331 = vld [vmem:[%s269 + $0x8] sm:$0xf]
        %v332 = vld [vmem:[%s269 + $0xc] sm:$0xf]
        %v333 = vld [vmem:[%s269 + $0x10] sm:$0xf]
        %v334 = vld [vmem:[%s269 + $0x14] sm:$0xf]
        %v335 = vld [vmem:[%s269 + $0x18] sm:$0xf]
        %v336 = vld [vmem:[%s269 + $0x1c] sm:$0xf]
        %v337 = vld [vmem:[%s269 + $0x20] sm:$0xf]
        %v338 = vld [vmem:[%s269 + $0x24] sm:$0xf]
        %v339 = vld [vmem:[%s269 + $0x28] sm:$0xf]
        %v340 = vld [vmem:[%s269 + $0x2c] sm:$0xf]
        %v341 = vld [vmem:[%s269 + $0x30] sm:$0xf]
        %v342 = vld [vmem:[%s269 + $0x34] sm:$0xf]
        %v343 = vld [vmem:[%s269 + $0x38] sm:$0xf]
        %v344 = vld [vmem:[%s269 + $0x3c] sm:$0xf]
        %v345 = vld [vmem:[%s278] sm:$0xf]
        %v346 = vld [vmem:[%s278 + $0x4] sm:$0xf]
        %v347 = vld [vmem:[%s278 + $0x8] sm:$0xf]
        %v348 = vld [vmem:[%s278 + $0xc] sm:$0xf]
        %v349 = vld [vmem:[%s278 + $0x10] sm:$0xf]
        %v350 = vld [vmem:[%s278 + $0x14] sm:$0xf]
        %v351 = vld [vmem:[%s278 + $0x18] sm:$0xf]
        %v352 = vld [vmem:[%s278 + $0x1c] sm:$0xf]
        %v353 = vld [vmem:[%s278 + $0x20] sm:$0xf]
        %v354 = vld [vmem:[%s278 + $0x24] sm:$0xf]
        %v355 = vld [vmem:[%s278 + $0x28] sm:$0xf]
        %v356 = vld [vmem:[%s278 + $0x2c] sm:$0xf]
        %v357 = vld [vmem:[%s278 + $0x30] sm:$0xf]
        %v358 = vld [vmem:[%s278 + $0x34] sm:$0xf]
        %v359 = vld [vmem:[%s278 + $0x38] sm:$0xf]
        %v360 = vld [vmem:[%s278 + $0x3c] sm:$0xf]
        %v361 = vld [vmem:[%s278 + $0x40] sm:$0xf]
        %v362 = vld [vmem:[%s278 + $0x44] sm:$0xf]
        %v363 = vld [vmem:[%s278 + $0x48] sm:$0xf]
        %v364 = vld [vmem:[%s278 + $0x4c] sm:$0xf]
        %v365 = vld [vmem:[%s278 + $0x50] sm:$0xf]
        %v366 = vld [vmem:[%s278 + $0x54] sm:$0xf]
        %v367 = vld [vmem:[%s278 + $0x58] sm:$0xf]
        %v368 = vld [vmem:[%s278 + $0x5c] sm:$0xf]
        %v369 = vld [vmem:[%s278 + $0x60] sm:$0xf]
        %v370 = vld [vmem:[%s278 + $0x64] sm:$0xf]
        %v371 = vld [vmem:[%s278 + $0x68] sm:$0xf]
        %v372 = vld [vmem:[%s278 + $0x6c] sm:$0xf]
        %v373 = vld [vmem:[%s278 + $0x70] sm:$0xf]
        %v374 = vld [vmem:[%s278 + $0x74] sm:$0xf]
        %v375 = vld [vmem:[%s278 + $0x78] sm:$0xf]
        %v376 = vld [vmem:[%s278 + $0x7c] sm:$0xf]
        %v377 = vld [vmem:[%s287] sm:$0xf]
        %v378 = vld [vmem:[%s287 + $0x4] sm:$0xf]
        %v379 = vld [vmem:[%s287 + $0x8] sm:$0xf]
        %v380 = vld [vmem:[%s287 + $0xc] sm:$0xf]
        %v381 = vld [vmem:[%s287 + $0x10] sm:$0xf]
        %v382 = vld [vmem:[%s287 + $0x14] sm:$0xf]
        %v383 = vld [vmem:[%s287 + $0x18] sm:$0xf]
        %v384 = vld [vmem:[%s287 + $0x1c] sm:$0xf]
        %v385 = vld [vmem:[%s287 + $0x20] sm:$0xf]
        %v386 = vld [vmem:[%s287 + $0x24] sm:$0xf]
        %v387 = vld [vmem:[%s287 + $0x28] sm:$0xf]
        %v388 = vld [vmem:[%s287 + $0x2c] sm:$0xf]
        %v389 = vld [vmem:[%s287 + $0x30] sm:$0xf]
        %v390 = vld [vmem:[%s287 + $0x34] sm:$0xf]
        %v391 = vld [vmem:[%s287 + $0x38] sm:$0xf]
        %v392 = vld [vmem:[%s287 + $0x3c] sm:$0xf]
        %v393 = vld [vmem:[%s287 + $0x40] sm:$0xf]
        %v394 = vld [vmem:[%s287 + $0x44] sm:$0xf]
        %v395 = vld [vmem:[%s287 + $0x48] sm:$0xf]
        %v396 = vld [vmem:[%s287 + $0x4c] sm:$0xf]
        %v397 = vld [vmem:[%s287 + $0x50] sm:$0xf]
        %v398 = vld [vmem:[%s287 + $0x54] sm:$0xf]
        %v399 = vld [vmem:[%s287 + $0x58] sm:$0xf]
        %v400 = vld [vmem:[%s287 + $0x5c] sm:$0xf]
        %v401 = vld [vmem:[%s287 + $0x60] sm:$0xf]
        %v402 = vld [vmem:[%s287 + $0x64] sm:$0xf]
        %v403 = vld [vmem:[%s287 + $0x68] sm:$0xf]
        %v404 = vld [vmem:[%s287 + $0x6c] sm:$0xf]
        %v405 = vld [vmem:[%s287 + $0x70] sm:$0xf]
        %v406 = vld [vmem:[%s287 + $0x74] sm:$0xf]
        %v407 = vld [vmem:[%s287 + $0x78] sm:$0xf]
        %v408 = vld [vmem:[%s287 + $0x7c] sm:$0xf]
        %v409 = vld [vmem:[#allocation8] sm:$0xff]
        %v410 = vld [vmem:[#allocation8 + $0x8] sm:$0xff]
        %v411 = vld [vmem:[#allocation8 + $0x10] sm:$0xff]
        %v412 = vld [vmem:[#allocation8 + $0x18] sm:$0xff]
        %v413 = vld [vmem:[#allocation8 + $0x20] sm:$0xff]
        %v414 = vld [vmem:[#allocation8 + $0x28] sm:$0xff]
        %v415 = vld [vmem:[#allocation8 + $0x30] sm:$0xff]
        %v416 = vld [vmem:[#allocation8 + $0x38] sm:$0xff]
        %v417 = vld [vmem:[#allocation8 + $0x40] sm:$0xff]
        %v418 = vld [vmem:[#allocation8 + $0x48] sm:$0xff]
        %v419 = vld [vmem:[#allocation8 + $0x50] sm:$0xff]
        %v420 = vld [vmem:[#allocation8 + $0x58] sm:$0xff]
        %v421 = vld [vmem:[#allocation8 + $0x60] sm:$0xff]
        %v422 = vld [vmem:[#allocation8 + $0x68] sm:$0xff]
        %v423 = vld [vmem:[#allocation8 + $0x70] sm:$0xff]
        %v424 = vld [vmem:[#allocation8 + $0x78] sm:$0xff]
        %v441 = vunpack.c.l.b16 %v329
        %v442 = vunpack.c.l.b16 %v330
        %v443 = vunpack.c.l.b16 %v331
        %v444 = vunpack.c.l.b16 %v332
        %v445 = vunpack.c.l.b16 %v333
        %v446 = vunpack.c.l.b16 %v334
        %v447 = vunpack.c.l.b16 %v335
        %v448 = vunpack.c.l.b16 %v336
        %v449 = vunpack.c.l.b16 %v337
        %v450 = vunpack.c.l.b16 %v338
        %v451 = vunpack.c.l.b16 %v339
        %v452 = vunpack.c.l.b16 %v340
        %v453 = vunpack.c.l.b16 %v341
        %v454 = vunpack.c.l.b16 %v342
        %v455 = vunpack.c.l.b16 %v343
        %v456 = vunpack.c.l.b16 %v344
        %v457 = vpack.c.b16 %v442, %v441
        %v458 = vpack.c.b16 %v444, %v443
        %v459 = vpack.c.b16 %v446, %v445
        %v460 = vpack.c.b16 %v448, %v447
        %v461 = vpack.c.b16 %v450, %v449
        %v462 = vpack.c.b16 %v452, %v451
        %v463 = vpack.c.b16 %v454, %v453
        %v464 = vpack.c.b16 %v456, %v455
        %v489 = vunpack.c.l.b16 %v409
        %v490 = vunpack.c.h.b16 %v409
        %v491 = vunpack.c.l.b16 %v410
        %v492 = vunpack.c.h.b16 %v410
        %v493 = vunpack.c.l.b16 %v411
        %v494 = vunpack.c.h.b16 %v411
        %v495 = vunpack.c.l.b16 %v412
        %v496 = vunpack.c.h.b16 %v412
        %v497 = vunpack.c.l.b16 %v413
        %v498 = vunpack.c.h.b16 %v413
        %v499 = vunpack.c.l.b16 %v414
        %v500 = vunpack.c.h.b16 %v414
        %v501 = vunpack.c.l.b16 %v415
        %v502 = vunpack.c.h.b16 %v415
        %v503 = vunpack.c.l.b16 %v416
        %v504 = vunpack.c.h.b16 %v416
        %v505 = vunpack.c.l.b16 %v417
        %v506 = vunpack.c.h.b16 %v417
        %v507 = vunpack.c.l.b16 %v418
        %v508 = vunpack.c.h.b16 %v418
        %v509 = vunpack.c.l.b16 %v419
        %v510 = vunpack.c.h.b16 %v419
        %v511 = vunpack.c.l.b16 %v420
        %v512 = vunpack.c.h.b16 %v420
        %v513 = vunpack.c.l.b16 %v421
        %v514 = vunpack.c.h.b16 %v421
        %v515 = vunpack.c.l.b16 %v422
        %v516 = vunpack.c.h.b16 %v422
        %v517 = vunpack.c.l.b16 %v423
        %v518 = vunpack.c.h.b16 %v423
        %v519 = vunpack.c.l.b16 %v424
        %v520 = vunpack.c.h.b16 %v424
        %v521 = vpack.c.b16 %v491, %v489
        %v522 = vpack.c.b16 %v492, %v490
        %v523 = vpack.c.b16 %v495, %v493
        %v524 = vpack.c.b16 %v496, %v494
        %v525 = vpack.c.b16 %v499, %v497
        %v526 = vpack.c.b16 %v500, %v498
        %v527 = vpack.c.b16 %v503, %v501
        %v528 = vpack.c.b16 %v504, %v502
        %v529 = vpack.c.b16 %v507, %v505
        %v530 = vpack.c.b16 %v508, %v506
        %v531 = vpack.c.b16 %v511, %v509
        %v532 = vpack.c.b16 %v512, %v510
        %v533 = vpack.c.b16 %v515, %v513
        %v534 = vpack.c.b16 %v516, %v514
        %v535 = vpack.c.b16 %v519, %v517
        %v536 = vpack.c.b16 %v520, %v518
        %553 = vmatprep.subr.bf16.mxu0 %v522
        %554 = vmatpush1.bf16.msra.mxu0 %v521
        %555 = vmatprep.subr.bf16.mxu0 %v524
        %556 = vmatpush1.bf16.msra.mxu0 %v523
        %557 = vmatprep.subr.bf16.mxu0 %v526
        %558 = vmatpush1.bf16.msra.mxu0 %v525
        %559 = vmatprep.subr.bf16.mxu0 %v528
        %560 = vmatpush1.bf16.msra.mxu0 %v527
        %561 = vmatprep.subr.bf16.mxu0 %v530
        %562 = vmatpush1.bf16.msra.mxu0 %v529
        %563 = vmatprep.subr.bf16.mxu0 %v532
        %564 = vmatpush1.bf16.msra.mxu0 %v531
        %565 = vmatprep.subr.bf16.mxu0 %v534
        %566 = vmatpush1.bf16.msra.mxu0 %v533
        %567 = vmatprep.subr.bf16.mxu0 %v536
        %568 = vmatpush1.bf16.msra.mxu0 %v535
        %569 = vmatprep.subr.bf16.mxu0 0
        %570 = vmatpush1.bf16.msra.mxu0 0
        %571 = vmatprep.subr.bf16.mxu0 0
        %572 = vmatpush1.bf16.msra.mxu0 0
        %573 = vmatprep.subr.bf16.mxu0 0
        %574 = vmatpush1.bf16.msra.mxu0 0
        %575 = vmatprep.subr.bf16.mxu0 0
        %576 = vmatpush1.bf16.msra.mxu0 0
        %577 = vmatprep.subr.bf16.mxu0 0
        %578 = vmatpush1.bf16.msra.mxu0 0
        %579 = vmatprep.subr.bf16.mxu0 0
        %580 = vmatpush1.bf16.msra.mxu0 0
        %581 = vmatprep.subr.bf16.mxu0 0
        %582 = vmatpush1.bf16.msra.mxu0 0
        %583 = vmatprep.subr.bf16.mxu0 0
        %584 = vmatpush1.bf16.msra.mxu0 0
        %585 = vmatprep.mubr.bf16.mxu0 0
        %586 = vmatmul.mubr.bf16.gmra.mrb[0].mxu0 %v457
        %v587 = vpop.f32.mrb[0].mxu0
        %v588 = vadd.f32 0.0, %v587
        %v589 = vpop.f32.mrb[0].mxu0
        %v590 = vadd.f32 0.0, %v589
        %v591 = vpop.f32.mrb[0].mxu0
        %v592 = vadd.f32 0.0, %v591
        %v593 = vpop.f32.mrb[0].mxu0
        %v594 = vadd.f32 0.0, %v593
        %595 = vmatprep.mubr.bf16.mxu0 0
        %596 = vmatmul.mubr.bf16.gmra.mrb[0].mxu0 %v458
        %v597 = vpop.f32.mrb[0].mxu0
        %v598 = vadd.f32 0.0, %v597
        %v599 = vpop.f32.mrb[0].mxu0
        %v600 = vadd.f32 0.0, %v599
        %v601 = vpop.f32.mrb[0].mxu0
        %v602 = vadd.f32 0.0, %v601
        %v603 = vpop.f32.mrb[0].mxu0
        %v604 = vadd.f32 0.0, %v603
        %605 = vmatprep.mubr.bf16.mxu0 0
        %606 = vmatmul.mubr.bf16.gmra.mrb[0].mxu0 %v459
        %v607 = vpop.f32.mrb[0].mxu0
        %v608 = vadd.f32 0.0, %v607
        %v609 = vpop.f32.mrb[0].mxu0
        %v610 = vadd.f32 0.0, %v609
        %v611 = vpop.f32.mrb[0].mxu0
        %v612 = vadd.f32 0.0, %v611
        %v613 = vpop.f32.mrb[0].mxu0
        %v614 = vadd.f32 0.0, %v613
        %615 = vmatprep.mubr.bf16.mxu0 0
        %616 = vmatmul.mubr.bf16.gmra.mrb[0].mxu0 %v460
        %v617 = vpop.f32.mrb[0].mxu0
        %v618 = vadd.f32 0.0, %v617
        %v619 = vpop.f32.mrb[0].mxu0
        %v620 = vadd.f32 0.0, %v619
        %v621 = vpop.f32.mrb[0].mxu0
        %v622 = vadd.f32 0.0, %v621
        %v623 = vpop.f32.mrb[0].mxu0
        %v624 = vadd.f32 0.0, %v623
        %625 = vmatprep.mubr.bf16.mxu0 0
        %626 = vmatmul.mubr.bf16.gmra.mrb[0].mxu0 %v461
        %v627 = vpop.f32.mrb[0].mxu0
        %v628 = vadd.f32 0.0, %v627
        %v629 = vpop.f32.mrb[0].mxu0
        %v630 = vadd.f32 0.0, %v629
        %v631 = vpop.f32.mrb[0].mxu0
        %v632 = vadd.f32 0.0, %v631
        %v633 = vpop.f32.mrb[0].mxu0
        %v634 = vadd.f32 0.0, %v633
        %635 = vmatprep.mubr.bf16.mxu0 0
        %636 = vmatmul.mubr.bf16.gmra.mrb[0].mxu0 %v462
        %v637 = vpop.f32.mrb[0].mxu0
        %v638 = vadd.f32 0.0, %v637
        %v639 = vpop.f32.mrb[0].mxu0
        %v640 = vadd.f32 0.0, %v639
        %v641 = vpop.f32.mrb[0].mxu0
        %v642 = vadd.f32 0.0, %v641
        %v643 = vpop.f32.mrb[0].mxu0
        %v644 = vadd.f32 0.0, %v643
        %645 = vmatprep.mubr.bf16.mxu0 0
        %646 = vmatmul.mubr.bf16.gmra.mrb[0].mxu0 %v463
        %v647 = vpop.f32.mrb[0].mxu0
        %v648 = vadd.f32 0.0, %v647
        %v649 = vpop.f32.mrb[0].mxu0
        %v650 = vadd.f32 0.0, %v649
        %v651 = vpop.f32.mrb[0].mxu0
        %v652 = vadd.f32 0.0, %v651
        %v653 = vpop.f32.mrb[0].mxu0
        %v654 = vadd.f32 0.0, %v653
        %655 = vmatprep.mubr.bf16.mxu0 0
        %656 = vmatmul.mubr.bf16.gmra.mrb[0].mxu0 %v464
        %v657 = vpop.f32.mrb[0].mxu0
        %v658 = vadd.f32 0.0, %v657
        %v659 = vpop.f32.mrb[0].mxu0
        %v660 = vadd.f32 0.0, %v659
        %v661 = vpop.f32.mrb[0].mxu0
        %v662 = vadd.f32 0.0, %v661
        %v663 = vpop.f32.mrb[0].mxu0
        %v664 = vadd.f32 0.0, %v663
        %665 = vdwg.mxu0
        %s666 = smul.u32 %s30, 128
        %v667 = vlaneseq
        %v668 = vshrl.u32 %v667, 7
        %v669 = vadd.s32 %v668, 8
        %v670 = vadd.s32 %v668, 16
        %v671 = vadd.s32 %v668, 24
        %v672 = vadd.s32 %v668, 32
        %v673 = vadd.s32 %v668, 40
        %v674 = vadd.s32 %v668, 48
        %v675 = vadd.s32 %v668, 56
        %v676 = vadd.s32 %v668, 64
        %v677 = vadd.s32 %v668, 72
        %v678 = vadd.s32 %v668, 80
        %v679 = vadd.s32 %v668, 88
        %v680 = vadd.s32 %v668, 96
        %v681 = vadd.s32 %v668, 104
        %v682 = vadd.s32 %v668, 112
        %v683 = vadd.s32 %v668, 120
        %v684 = vstv %s666
        %v685 = vadd.s32 %v684, %v668
        %v686 = vadd.s32 %v684, %v669
        %v687 = vadd.s32 %v684, %v670
        %v688 = vadd.s32 %v684, %v671
        %v689 = vadd.s32 %v684, %v672
        %v690 = vadd.s32 %v684, %v673
        %v691 = vadd.s32 %v684, %v674
        %v692 = vadd.s32 %v684, %v675
        %v693 = vadd.s32 %v684, %v676
        %v694 = vadd.s32 %v684, %v677
        %v695 = vadd.s32 %v684, %v678
        %v696 = vadd.s32 %v684, %v679
        %v697 = vadd.s32 %v684, %v680
        %v698 = vadd.s32 %v684, %v681
        %v699 = vadd.s32 %v684, %v682
        %v700 = vadd.s32 %v684, %v683
        %701 = vrot.lane.b32.xlu0 %v588, 1
        %v702 = vpop.permute.xlu0 %701
        %703 = vrot.lane.b32.xlu0 %v592, 1
        %v704 = vpop.permute.xlu0 %703
        %705 = vrot.lane.b32.xlu0 %v598, 1
        %v706 = vpop.permute.xlu0 %705
        %707 = vrot.lane.b32.xlu0 %v602, 1
        %v708 = vpop.permute.xlu0 %707
        %709 = vrot.lane.b32.xlu0 %v608, 1
        %v710 = vpop.permute.xlu0 %709
        %711 = vrot.lane.b32.xlu0 %v612, 1
        %v712 = vpop.permute.xlu0 %711
        %713 = vrot.lane.b32.xlu0 %v618, 1
        %v714 = vpop.permute.xlu0 %713
        %715 = vrot.lane.b32.xlu0 %v622, 1
        %v716 = vpop.permute.xlu0 %715
        %717 = vrot.lane.b32.xlu0 %v628, 1
        %v718 = vpop.permute.xlu0 %717
        %719 = vrot.lane.b32.xlu0 %v632, 1
        %v720 = vpop.permute.xlu0 %719
        %721 = vrot.lane.b32.xlu0 %v638, 1
        %v722 = vpop.permute.xlu0 %721
        %723 = vrot.lane.b32.xlu0 %v642, 1
        %v724 = vpop.permute.xlu0 %723
        %725 = vrot.lane.b32.xlu0 %v648, 1
        %v726 = vpop.permute.xlu0 %725
        %727 = vrot.lane.b32.xlu0 %v652, 1
        %v728 = vpop.permute.xlu0 %727
        %729 = vrot.lane.b32.xlu0 %v658, 1
        %v730 = vpop.permute.xlu0 %729
        %731 = vrot.lane.b32.xlu0 %v662, 1
        %v732 = vpop.permute.xlu0 %731
        %733 = vrot.lane.b32.xlu0 %v590, 1
        %v734 = vpop.permute.xlu0 %733
        %735 = vrot.lane.b32.xlu0 %v594, 1
        %v736 = vpop.permute.xlu0 %735
        %737 = vrot.lane.b32.xlu0 %v600, 1
        %v738 = vpop.permute.xlu0 %737
        %739 = vrot.lane.b32.xlu0 %v604, 1
        %v740 = vpop.permute.xlu0 %739
        %741 = vrot.lane.b32.xlu0 %v610, 1
        %v742 = vpop.permute.xlu0 %741
        %743 = vrot.lane.b32.xlu0 %v614, 1
        %v744 = vpop.permute.xlu0 %743
        %745 = vrot.lane.b32.xlu0 %v620, 1
        %v746 = vpop.permute.xlu0 %745
        %747 = vrot.lane.b32.xlu0 %v624, 1
        %v748 = vpop.permute.xlu0 %747
        %749 = vrot.lane.b32.xlu0 %v630, 1
        %v750 = vpop.permute.xlu0 %749
        %751 = vrot.lane.b32.xlu0 %v634, 1
        %v752 = vpop.permute.xlu0 %751
        %753 = vrot.lane.b32.xlu0 %v640, 1
        %v754 = vpop.permute.xlu0 %753
        %755 = vrot.lane.b32.xlu0 %v644, 1
        %v756 = vpop.permute.xlu0 %755
        %757 = vrot.lane.b32.xlu0 %v650, 1
        %v758 = vpop.permute.xlu0 %757
        %759 = vrot.lane.b32.xlu0 %v654, 1
        %v760 = vpop.permute.xlu0 %759
        %761 = vrot.lane.b32.xlu0 %v660, 1
        %v762 = vpop.permute.xlu0 %761
        %763 = vrot.lane.b32.xlu0 %v664, 1
        %v764 = vpop.permute.xlu0 %763
        %v765 = vlaneseq
        %v766 = vand.u32 %v765, 127
        %vm767 = vcmp.lt.s32.totalorder %v766, 1
        %v768 = vsel %vm767, %v702, %v734
        %v769 = vsel %vm767, %v704, %v736
        %v770 = vsel %vm767, %v706, %v738
        %v771 = vsel %vm767, %v708, %v740
        %v772 = vsel %vm767, %v710, %v742
        %v773 = vsel %vm767, %v712, %v744
        %v774 = vsel %vm767, %v714, %v746
        %v775 = vsel %vm767, %v716, %v748
        %v776 = vsel %vm767, %v718, %v750
        %v777 = vsel %vm767, %v720, %v752
        %v778 = vsel %vm767, %v722, %v754
        %v779 = vsel %vm767, %v724, %v756
        %v780 = vsel %vm767, %v726, %v758
        %v781 = vsel %vm767, %v728, %v760
        %v782 = vsel %vm767, %v730, %v762
        %v783 = vsel %vm767, %v732, %v764
        %v784 = vsel %vm767, %v734, %v702
        %v785 = vsel %vm767, %v736, %v704
        %v786 = vsel %vm767, %v738, %v706
        %v787 = vsel %vm767, %v740, %v708
        %v788 = vsel %vm767, %v742, %v710
        %v789 = vsel %vm767, %v744, %v712
        %v790 = vsel %vm767, %v746, %v714
        %v791 = vsel %vm767, %v748, %v716
        %v792 = vsel %vm767, %v750, %v718
        %v793 = vsel %vm767, %v752, %v720
        %v794 = vsel %vm767, %v754, %v722
        %v795 = vsel %vm767, %v756, %v724
        %v796 = vsel %vm767, %v758, %v726
        %v797 = vsel %vm767, %v760, %v728
        %v798 = vsel %vm767, %v762, %v730
        %v799 = vsel %vm767, %v764, %v732
        %v800 = vand.u32 %v685, 1
        %v801 = vand.u32 %v686, 1
        %v802 = vand.u32 %v687, 1
        %v803 = vand.u32 %v688, 1
        %v804 = vand.u32 %v689, 1
        %v805 = vand.u32 %v690, 1
        %v806 = vand.u32 %v691, 1
        %v807 = vand.u32 %v692, 1
        %v808 = vand.u32 %v693, 1
        %v809 = vand.u32 %v694, 1
        %v810 = vand.u32 %v695, 1
        %v811 = vand.u32 %v696, 1
        %v812 = vand.u32 %v697, 1
        %v813 = vand.u32 %v698, 1
        %v814 = vand.u32 %v699, 1
        %v815 = vand.u32 %v700, 1
        %vm816 = vcmp.ne.s32.totalorder %v800, 0
        %vm817 = vcmp.ne.s32.totalorder %v801, 0
        %vm818 = vcmp.ne.s32.totalorder %v802, 0
        %vm819 = vcmp.ne.s32.totalorder %v803, 0
        %vm820 = vcmp.ne.s32.totalorder %v804, 0
        %vm821 = vcmp.ne.s32.totalorder %v805, 0
        %vm822 = vcmp.ne.s32.totalorder %v806, 0
        %vm823 = vcmp.ne.s32.totalorder %v807, 0
        %vm824 = vcmp.ne.s32.totalorder %v808, 0
        %vm825 = vcmp.ne.s32.totalorder %v809, 0
        %vm826 = vcmp.ne.s32.totalorder %v810, 0
        %vm827 = vcmp.ne.s32.totalorder %v811, 0
        %vm828 = vcmp.ne.s32.totalorder %v812, 0
        %vm829 = vcmp.ne.s32.totalorder %v813, 0
        %vm830 = vcmp.ne.s32.totalorder %v814, 0
        %vm831 = vcmp.ne.s32.totalorder %v815, 0
        %v832 = vsel %vm816, 1, 0
        %v833 = vsel %vm817, 1, 0
        %v834 = vsel %vm818, 1, 0
        %v835 = vsel %vm819, 1, 0
        %v836 = vsel %vm820, 1, 0
        %v837 = vsel %vm821, 1, 0
        %v838 = vsel %vm822, 1, 0
        %v839 = vsel %vm823, 1, 0
        %v840 = vsel %vm824, 1, 0
        %v841 = vsel %vm825, 1, 0
        %v842 = vsel %vm826, 1, 0
        %v843 = vsel %vm827, 1, 0
        %v844 = vsel %vm828, 1, 0
        %v845 = vsel %vm829, 1, 0
        %v846 = vsel %vm830, 1, 0
        %v847 = vsel %vm831, 1, 0
        %vm848 = vcmp.eq.s32.totalorder %v832, 1
        %vm849 = vcmp.eq.s32.totalorder %v833, 1
        %vm850 = vcmp.eq.s32.totalorder %v834, 1
        %vm851 = vcmp.eq.s32.totalorder %v835, 1
        %vm852 = vcmp.eq.s32.totalorder %v836, 1
        %vm853 = vcmp.eq.s32.totalorder %v837, 1
        %vm854 = vcmp.eq.s32.totalorder %v838, 1
        %vm855 = vcmp.eq.s32.totalorder %v839, 1
        %vm856 = vcmp.eq.s32.totalorder %v840, 1
        %vm857 = vcmp.eq.s32.totalorder %v841, 1
        %vm858 = vcmp.eq.s32.totalorder %v842, 1
        %vm859 = vcmp.eq.s32.totalorder %v843, 1
        %vm860 = vcmp.eq.s32.totalorder %v844, 1
        %vm861 = vcmp.eq.s32.totalorder %v845, 1
        %vm862 = vcmp.eq.s32.totalorder %v846, 1
        %vm863 = vcmp.eq.s32.totalorder %v847, 1
        %v864 = vsel %vm848, %v784, %v588
        %v865 = vsel %vm848, %v768, %v590
        %v866 = vsel %vm849, %v785, %v592
        %v867 = vsel %vm849, %v769, %v594
        %v868 = vsel %vm850, %v786, %v598
        %v869 = vsel %vm850, %v770, %v600
        %v870 = vsel %vm851, %v787, %v602
        %v871 = vsel %vm851, %v771, %v604
        %v872 = vsel %vm852, %v788, %v608
        %v873 = vsel %vm852, %v772, %v610
        %v874 = vsel %vm853, %v789, %v612
        %v875 = vsel %vm853, %v773, %v614
        %v876 = vsel %vm854, %v790, %v618
        %v877 = vsel %vm854, %v774, %v620
        %v878 = vsel %vm855, %v791, %v622
        %v879 = vsel %vm855, %v775, %v624
        %v880 = vsel %vm856, %v792, %v628
        %v881 = vsel %vm856, %v776, %v630
        %v882 = vsel %vm857, %v793, %v632
        %v883 = vsel %vm857, %v777, %v634
        %v884 = vsel %vm858, %v794, %v638
        %v885 = vsel %vm858, %v778, %v640
        %v886 = vsel %vm859, %v795, %v642
        %v887 = vsel %vm859, %v779, %v644
        %v888 = vsel %vm860, %v796, %v648
        %v889 = vsel %vm860, %v780, %v650
        %v890 = vsel %vm861, %v797, %v652
        %v891 = vsel %vm861, %v781, %v654
        %v892 = vsel %vm862, %v798, %v658
        %v893 = vsel %vm862, %v782, %v660
        %v894 = vsel %vm863, %v799, %v662
        %v895 = vsel %vm863, %v783, %v664
        %896 = vrot.lane.b32.xlu0 %v864, 2
        %v897 = vpop.permute.xlu0 %896
        %898 = vrot.lane.b32.xlu0 %v866, 2
        %v899 = vpop.permute.xlu0 %898
        %900 = vrot.lane.b32.xlu0 %v868, 2
        %v901 = vpop.permute.xlu0 %900
        %902 = vrot.lane.b32.xlu0 %v870, 2
        %v903 = vpop.permute.xlu0 %902
        %904 = vrot.lane.b32.xlu0 %v872, 2
        %v905 = vpop.permute.xlu0 %904
        %906 = vrot.lane.b32.xlu0 %v874, 2
        %v907 = vpop.permute.xlu0 %906
        %908 = vrot.lane.b32.xlu0 %v876, 2
        %v909 = vpop.permute.xlu0 %908
        %910 = vrot.lane.b32.xlu0 %v878, 2
        %v911 = vpop.permute.xlu0 %910
        %912 = vrot.lane.b32.xlu0 %v880, 2
        %v913 = vpop.permute.xlu0 %912
        %914 = vrot.lane.b32.xlu0 %v882, 2
        %v915 = vpop.permute.xlu0 %914
        %916 = vrot.lane.b32.xlu0 %v884, 2
        %v917 = vpop.permute.xlu0 %916
        %918 = vrot.lane.b32.xlu0 %v886, 2
        %v919 = vpop.permute.xlu0 %918
        %920 = vrot.lane.b32.xlu0 %v888, 2
        %v921 = vpop.permute.xlu0 %920
        %922 = vrot.lane.b32.xlu0 %v890, 2
        %v923 = vpop.permute.xlu0 %922
        %924 = vrot.lane.b32.xlu0 %v892, 2
        %v925 = vpop.permute.xlu0 %924
        %926 = vrot.lane.b32.xlu0 %v894, 2
        %v927 = vpop.permute.xlu0 %926
        %928 = vrot.lane.b32.xlu0 %v865, 2
        %v929 = vpop.permute.xlu0 %928
        %930 = vrot.lane.b32.xlu0 %v867, 2
        %v931 = vpop.permute.xlu0 %930
        %932 = vrot.lane.b32.xlu0 %v869, 2
        %v933 = vpop.permute.xlu0 %932
        %934 = vrot.lane.b32.xlu0 %v871, 2
        %v935 = vpop.permute.xlu0 %934
        %936 = vrot.lane.b32.xlu0 %v873, 2
        %v937 = vpop.permute.xlu0 %936
        %938 = vrot.lane.b32.xlu0 %v875, 2
        %v939 = vpop.permute.xlu0 %938
        %940 = vrot.lane.b32.xlu0 %v877, 2
        %v941 = vpop.permute.xlu0 %940
        %942 = vrot.lane.b32.xlu0 %v879, 2
        %v943 = vpop.permute.xlu0 %942
        %944 = vrot.lane.b32.xlu0 %v881, 2
        %v945 = vpop.permute.xlu0 %944
        %946 = vrot.lane.b32.xlu0 %v883, 2
        %v947 = vpop.permute.xlu0 %946
        %948 = vrot.lane.b32.xlu0 %v885, 2
        %v949 = vpop.permute.xlu0 %948
        %950 = vrot.lane.b32.xlu0 %v887, 2
        %v951 = vpop.permute.xlu0 %950
        %952 = vrot.lane.b32.xlu0 %v889, 2
        %v953 = vpop.permute.xlu0 %952
        %954 = vrot.lane.b32.xlu0 %v891, 2
        %v955 = vpop.permute.xlu0 %954
        %956 = vrot.lane.b32.xlu0 %v893, 2
        %v957 = vpop.permute.xlu0 %956
        %958 = vrot.lane.b32.xlu0 %v895, 2
        %v959 = vpop.permute.xlu0 %958
        %vm960 = vcmp.lt.s32.totalorder %v766, 2
        %v961 = vsel %vm960, %v897, %v929
        %v962 = vsel %vm960, %v899, %v931
        %v963 = vsel %vm960, %v901, %v933
        %v964 = vsel %vm960, %v903, %v935
        %v965 = vsel %vm960, %v905, %v937
        %v966 = vsel %vm960, %v907, %v939
        %v967 = vsel %vm960, %v909, %v941
        %v968 = vsel %vm960, %v911, %v943
        %v969 = vsel %vm960, %v913, %v945
        %v970 = vsel %vm960, %v915, %v947
        %v971 = vsel %vm960, %v917, %v949
        %v972 = vsel %vm960, %v919, %v951
        %v973 = vsel %vm960, %v921, %v953
        %v974 = vsel %vm960, %v923, %v955
        %v975 = vsel %vm960, %v925, %v957
        %v976 = vsel %vm960, %v927, %v959
        %v977 = vsel %vm960, %v929, %v897
        %v978 = vsel %vm960, %v931, %v899
        %v979 = vsel %vm960, %v933, %v901
        %v980 = vsel %vm960, %v935, %v903
        %v981 = vsel %vm960, %v937, %v905
        %v982 = vsel %vm960, %v939, %v907
        %v983 = vsel %vm960, %v941, %v909
        %v984 = vsel %vm960, %v943, %v911
        %v985 = vsel %vm960, %v945, %v913
        %v986 = vsel %vm960, %v947, %v915
        %v987 = vsel %vm960, %v949, %v917
        %v988 = vsel %vm960, %v951, %v919
        %v989 = vsel %vm960, %v953, %v921
        %v990 = vsel %vm960, %v955, %v923
        %v991 = vsel %vm960, %v957, %v925
        %v992 = vsel %vm960, %v959, %v927
        %v993 = vand.u32 %v685, 2
        %v994 = vand.u32 %v686, 2
        %v995 = vand.u32 %v687, 2
        %v996 = vand.u32 %v688, 2
        %v997 = vand.u32 %v689, 2
        %v998 = vand.u32 %v690, 2
        %v999 = vand.u32 %v691, 2
        %v1000 = vand.u32 %v692, 2
        %v1001 = vand.u32 %v693, 2
        %v1002 = vand.u32 %v694, 2
        %v1003 = vand.u32 %v695, 2
        %v1004 = vand.u32 %v696, 2
        %v1005 = vand.u32 %v697, 2
        %v1006 = vand.u32 %v698, 2
        %v1007 = vand.u32 %v699, 2
        %v1008 = vand.u32 %v700, 2
        %vm1009 = vcmp.ne.s32.totalorder %v993, 0
        %vm1010 = vcmp.ne.s32.totalorder %v994, 0
        %vm1011 = vcmp.ne.s32.totalorder %v995, 0
        %vm1012 = vcmp.ne.s32.totalorder %v996, 0
        %vm1013 = vcmp.ne.s32.totalorder %v997, 0
        %vm1014 = vcmp.ne.s32.totalorder %v998, 0
        %vm1015 = vcmp.ne.s32.totalorder %v999, 0
        %vm1016 = vcmp.ne.s32.totalorder %v1000, 0
        %vm1017 = vcmp.ne.s32.totalorder %v1001, 0
        %vm1018 = vcmp.ne.s32.totalorder %v1002, 0
        %vm1019 = vcmp.ne.s32.totalorder %v1003, 0
        %vm1020 = vcmp.ne.s32.totalorder %v1004, 0
        %vm1021 = vcmp.ne.s32.totalorder %v1005, 0
        %vm1022 = vcmp.ne.s32.totalorder %v1006, 0
        %vm1023 = vcmp.ne.s32.totalorder %v1007, 0
        %vm1024 = vcmp.ne.s32.totalorder %v1008, 0
        %v1025 = vsel %vm1009, 1, 0
        %v1026 = vsel %vm1010, 1, 0
        %v1027 = vsel %vm1011, 1, 0
        %v1028 = vsel %vm1012, 1, 0
        %v1029 = vsel %vm1013, 1, 0
        %v1030 = vsel %vm1014, 1, 0
        %v1031 = vsel %vm1015, 1, 0
        %v1032 = vsel %vm1016, 1, 0
        %v1033 = vsel %vm1017, 1, 0
        %v1034 = vsel %vm1018, 1, 0
        %v1035 = vsel %vm1019, 1, 0
        %v1036 = vsel %vm1020, 1, 0
        %v1037 = vsel %vm1021, 1, 0
        %v1038 = vsel %vm1022, 1, 0
        %v1039 = vsel %vm1023, 1, 0
        %v1040 = vsel %vm1024, 1, 0
        %vm1041 = vcmp.eq.s32.totalorder %v1025, 1
        %vm1042 = vcmp.eq.s32.totalorder %v1026, 1
        %vm1043 = vcmp.eq.s32.totalorder %v1027, 1
        %vm1044 = vcmp.eq.s32.totalorder %v1028, 1
        %vm1045 = vcmp.eq.s32.totalorder %v1029, 1
        %vm1046 = vcmp.eq.s32.totalorder %v1030, 1
        %vm1047 = vcmp.eq.s32.totalorder %v1031, 1
        %vm1048 = vcmp.eq.s32.totalorder %v1032, 1
        %vm1049 = vcmp.eq.s32.totalorder %v1033, 1
        %vm1050 = vcmp.eq.s32.totalorder %v1034, 1
        %vm1051 = vcmp.eq.s32.totalorder %v1035, 1
        %vm1052 = vcmp.eq.s32.totalorder %v1036, 1
        %vm1053 = vcmp.eq.s32.totalorder %v1037, 1
        %vm1054 = vcmp.eq.s32.totalorder %v1038, 1
        %vm1055 = vcmp.eq.s32.totalorder %v1039, 1
        %vm1056 = vcmp.eq.s32.totalorder %v1040, 1
        %v1057 = vsel %vm1041, %v977, %v864
        %v1058 = vsel %vm1041, %v961, %v865
        %v1059 = vsel %vm1042, %v978, %v866
        %v1060 = vsel %vm1042, %v962, %v867
        %v1061 = vsel %vm1043, %v979, %v868
        %v1062 = vsel %vm1043, %v963, %v869
        %v1063 = vsel %vm1044, %v980, %v870
        %v1064 = vsel %vm1044, %v964, %v871
        %v1065 = vsel %vm1045, %v981, %v872
        %v1066 = vsel %vm1045, %v965, %v873
        %v1067 = vsel %vm1046, %v982, %v874
        %v1068 = vsel %vm1046, %v966, %v875
        %v1069 = vsel %vm1047, %v983, %v876
        %v1070 = vsel %vm1047, %v967, %v877
        %v1071 = vsel %vm1048, %v984, %v878
        %v1072 = vsel %vm1048, %v968, %v879
        %v1073 = vsel %vm1049, %v985, %v880
        %v1074 = vsel %vm1049, %v969, %v881
        %v1075 = vsel %vm1050, %v986, %v882
        %v1076 = vsel %vm1050, %v970, %v883
        %v1077 = vsel %vm1051, %v987, %v884
        %v1078 = vsel %vm1051, %v971, %v885
        %v1079 = vsel %vm1052, %v988, %v886
        %v1080 = vsel %vm1052, %v972, %v887
        %v1081 = vsel %vm1053, %v989, %v888
        %v1082 = vsel %vm1053, %v973, %v889
        %v1083 = vsel %vm1054, %v990, %v890
        %v1084 = vsel %vm1054, %v974, %v891
        %v1085 = vsel %vm1055, %v991, %v892
        %v1086 = vsel %vm1055, %v975, %v893
        %v1087 = vsel %vm1056, %v992, %v894
        %v1088 = vsel %vm1056, %v976, %v895
        %1089 = vrot.lane.b32.xlu0 %v1057, 4
        %v1090 = vpop.permute.xlu0 %1089
        %1091 = vrot.lane.b32.xlu0 %v1059, 4
        %v1092 = vpop.permute.xlu0 %1091
        %1093 = vrot.lane.b32.xlu0 %v1061, 4
        %v1094 = vpop.permute.xlu0 %1093
        %1095 = vrot.lane.b32.xlu0 %v1063, 4
        %v1096 = vpop.permute.xlu0 %1095
        %1097 = vrot.lane.b32.xlu0 %v1065, 4
        %v1098 = vpop.permute.xlu0 %1097
        %1099 = vrot.lane.b32.xlu0 %v1067, 4
        %v1100 = vpop.permute.xlu0 %1099
        %1101 = vrot.lane.b32.xlu0 %v1069, 4
        %v1102 = vpop.permute.xlu0 %1101
        %1103 = vrot.lane.b32.xlu0 %v1071, 4
        %v1104 = vpop.permute.xlu0 %1103
        %1105 = vrot.lane.b32.xlu0 %v1073, 4
        %v1106 = vpop.permute.xlu0 %1105
        %1107 = vrot.lane.b32.xlu0 %v1075, 4
        %v1108 = vpop.permute.xlu0 %1107
        %1109 = vrot.lane.b32.xlu0 %v1077, 4
        %v1110 = vpop.permute.xlu0 %1109
        %1111 = vrot.lane.b32.xlu0 %v1079, 4
        %v1112 = vpop.permute.xlu0 %1111
        %1113 = vrot.lane.b32.xlu0 %v1081, 4
        %v1114 = vpop.permute.xlu0 %1113
        %1115 = vrot.lane.b32.xlu0 %v1083, 4
        %v1116 = vpop.permute.xlu0 %1115
        %1117 = vrot.lane.b32.xlu0 %v1085, 4
        %v1118 = vpop.permute.xlu0 %1117
        %1119 = vrot.lane.b32.xlu0 %v1087, 4
        %v1120 = vpop.permute.xlu0 %1119
        %1121 = vrot.lane.b32.xlu0 %v1058, 4
        %v1122 = vpop.permute.xlu0 %1121
        %1123 = vrot.lane.b32.xlu0 %v1060, 4
        %v1124 = vpop.permute.xlu0 %1123
        %1125 = vrot.lane.b32.xlu0 %v1062, 4
        %v1126 = vpop.permute.xlu0 %1125
        %1127 = vrot.lane.b32.xlu0 %v1064, 4
        %v1128 = vpop.permute.xlu0 %1127
        %1129 = vrot.lane.b32.xlu0 %v1066, 4
        %v1130 = vpop.permute.xlu0 %1129
        %1131 = vrot.lane.b32.xlu0 %v1068, 4
        %v1132 = vpop.permute.xlu0 %1131
        %1133 = vrot.lane.b32.xlu0 %v1070, 4
        %v1134 = vpop.permute.xlu0 %1133
        %1135 = vrot.lane.b32.xlu0 %v1072, 4
        %v1136 = vpop.permute.xlu0 %1135
        %1137 = vrot.lane.b32.xlu0 %v1074, 4
        %v1138 = vpop.permute.xlu0 %1137
        %1139 = vrot.lane.b32.xlu0 %v1076, 4
        %v1140 = vpop.permute.xlu0 %1139
        %1141 = vrot.lane.b32.xlu0 %v1078, 4
        %v1142 = vpop.permute.xlu0 %1141
        %1143 = vrot.lane.b32.xlu0 %v1080, 4
        %v1144 = vpop.permute.xlu0 %1143
        %1145 = vrot.lane.b32.xlu0 %v1082, 4
        %v1146 = vpop.permute.xlu0 %1145
        %1147 = vrot.lane.b32.xlu0 %v1084, 4
        %v1148 = vpop.permute.xlu0 %1147
        %1149 = vrot.lane.b32.xlu0 %v1086, 4
        %v1150 = vpop.permute.xlu0 %1149
        %1151 = vrot.lane.b32.xlu0 %v1088, 4
        %v1152 = vpop.permute.xlu0 %1151
        %vm1153 = vcmp.lt.s32.totalorder %v766, 4
        %v1154 = vsel %vm1153, %v1090, %v1122
        %v1155 = vsel %vm1153, %v1092, %v1124
        %v1156 = vsel %vm1153, %v1094, %v1126
        %v1157 = vsel %vm1153, %v1096, %v1128
        %v1158 = vsel %vm1153, %v1098, %v1130
        %v1159 = vsel %vm1153, %v1100, %v1132
        %v1160 = vsel %vm1153, %v1102, %v1134
        %v1161 = vsel %vm1153, %v1104, %v1136
        %v1162 = vsel %vm1153, %v1106, %v1138
        %v1163 = vsel %vm1153, %v1108, %v1140
        %v1164 = vsel %vm1153, %v1110, %v1142
        %v1165 = vsel %vm1153, %v1112, %v1144
        %v1166 = vsel %vm1153, %v1114, %v1146
        %v1167 = vsel %vm1153, %v1116, %v1148
        %v1168 = vsel %vm1153, %v1118, %v1150
        %v1169 = vsel %vm1153, %v1120, %v1152
        %v1170 = vsel %vm1153, %v1122, %v1090
        %v1171 = vsel %vm1153, %v1124, %v1092
        %v1172 = vsel %vm1153, %v1126, %v1094
        %v1173 = vsel %vm1153, %v1128, %v1096
        %v1174 = vsel %vm1153, %v1130, %v1098
        %v1175 = vsel %vm1153, %v1132, %v1100
        %v1176 = vsel %vm1153, %v1134, %v1102
        %v1177 = vsel %vm1153, %v1136, %v1104
        %v1178 = vsel %vm1153, %v1138, %v1106
        %v1179 = vsel %vm1153, %v1140, %v1108
        %v1180 = vsel %vm1153, %v1142, %v1110
        %v1181 = vsel %vm1153, %v1144, %v1112
        %v1182 = vsel %vm1153, %v1146, %v1114
        %v1183 = vsel %vm1153, %v1148, %v1116
        %v1184 = vsel %vm1153, %v1150, %v1118
        %v1185 = vsel %vm1153, %v1152, %v1120
        %v1186 = vand.u32 %v685, 4
        %v1187 = vand.u32 %v686, 4
        %v1188 = vand.u32 %v687, 4
        %v1189 = vand.u32 %v688, 4
        %v1190 = vand.u32 %v689, 4
        %v1191 = vand.u32 %v690, 4
        %v1192 = vand.u32 %v691, 4
        %v1193 = vand.u32 %v692, 4
        %v1194 = vand.u32 %v693, 4
        %v1195 = vand.u32 %v694, 4
        %v1196 = vand.u32 %v695, 4
        %v1197 = vand.u32 %v696, 4
        %v1198 = vand.u32 %v697, 4
        %v1199 = vand.u32 %v698, 4
        %v1200 = vand.u32 %v699, 4
        %v1201 = vand.u32 %v700, 4
        %vm1202 = vcmp.ne.s32.totalorder %v1186, 0
        %vm1203 = vcmp.ne.s32.totalorder %v1187, 0
        %vm1204 = vcmp.ne.s32.totalorder %v1188, 0
        %vm1205 = vcmp.ne.s32.totalorder %v1189, 0
        %vm1206 = vcmp.ne.s32.totalorder %v1190, 0
        %vm1207 = vcmp.ne.s32.totalorder %v1191, 0
        %vm1208 = vcmp.ne.s32.totalorder %v1192, 0
        %vm1209 = vcmp.ne.s32.totalorder %v1193, 0
        %vm1210 = vcmp.ne.s32.totalorder %v1194, 0
        %vm1211 = vcmp.ne.s32.totalorder %v1195, 0
        %vm1212 = vcmp.ne.s32.totalorder %v1196, 0
        %vm1213 = vcmp.ne.s32.totalorder %v1197, 0
        %vm1214 = vcmp.ne.s32.totalorder %v1198, 0
        %vm1215 = vcmp.ne.s32.totalorder %v1199, 0
        %vm1216 = vcmp.ne.s32.totalorder %v1200, 0
        %vm1217 = vcmp.ne.s32.totalorder %v1201, 0
        %v1218 = vsel %vm1202, 1, 0
        %v1219 = vsel %vm1203, 1, 0
        %v1220 = vsel %vm1204, 1, 0
        %v1221 = vsel %vm1205, 1, 0
        %v1222 = vsel %vm1206, 1, 0
        %v1223 = vsel %vm1207, 1, 0
        %v1224 = vsel %vm1208, 1, 0
        %v1225 = vsel %vm1209, 1, 0
        %v1226 = vsel %vm1210, 1, 0
        %v1227 = vsel %vm1211, 1, 0
        %v1228 = vsel %vm1212, 1, 0
        %v1229 = vsel %vm1213, 1, 0
        %v1230 = vsel %vm1214, 1, 0
        %v1231 = vsel %vm1215, 1, 0
        %v1232 = vsel %vm1216, 1, 0
        %v1233 = vsel %vm1217, 1, 0
        %vm1234 = vcmp.eq.s32.totalorder %v1218, 1
        %vm1235 = vcmp.eq.s32.totalorder %v1219, 1
        %vm1236 = vcmp.eq.s32.totalorder %v1220, 1
        %vm1237 = vcmp.eq.s32.totalorder %v1221, 1
        %vm1238 = vcmp.eq.s32.totalorder %v1222, 1
        %vm1239 = vcmp.eq.s32.totalorder %v1223, 1
        %vm1240 = vcmp.eq.s32.totalorder %v1224, 1
        %vm1241 = vcmp.eq.s32.totalorder %v1225, 1
        %vm1242 = vcmp.eq.s32.totalorder %v1226, 1
        %vm1243 = vcmp.eq.s32.totalorder %v1227, 1
        %vm1244 = vcmp.eq.s32.totalorder %v1228, 1
        %vm1245 = vcmp.eq.s32.totalorder %v1229, 1
        %vm1246 = vcmp.eq.s32.totalorder %v1230, 1
        %vm1247 = vcmp.eq.s32.totalorder %v1231, 1
        %vm1248 = vcmp.eq.s32.totalorder %v1232, 1
        %vm1249 = vcmp.eq.s32.totalorder %v1233, 1
        %v1250 = vsel %vm1234, %v1170, %v1057
        %v1251 = vsel %vm1234, %v1154, %v1058
        %v1252 = vsel %vm1235, %v1171, %v1059
        %v1253 = vsel %vm1235, %v1155, %v1060
        %v1254 = vsel %vm1236, %v1172, %v1061
        %v1255 = vsel %vm1236, %v1156, %v1062
        %v1256 = vsel %vm1237, %v1173, %v1063
        %v1257 = vsel %vm1237, %v1157, %v1064
        %v1258 = vsel %vm1238, %v1174, %v1065
        %v1259 = vsel %vm1238, %v1158, %v1066
        %v1260 = vsel %vm1239, %v1175, %v1067
        %v1261 = vsel %vm1239, %v1159, %v1068
        %v1262 = vsel %vm1240, %v1176, %v1069
        %v1263 = vsel %vm1240, %v1160, %v1070
        %v1264 = vsel %vm1241, %v1177, %v1071
        %v1265 = vsel %vm1241, %v1161, %v1072
        %v1266 = vsel %vm1242, %v1178, %v1073
        %v1267 = vsel %vm1242, %v1162, %v1074
        %v1268 = vsel %vm1243, %v1179, %v1075
        %v1269 = vsel %vm1243, %v1163, %v1076
        %v1270 = vsel %vm1244, %v1180, %v1077
        %v1271 = vsel %vm1244, %v1164, %v1078
        %v1272 = vsel %vm1245, %v1181, %v1079
        %v1273 = vsel %vm1245, %v1165, %v1080
        %v1274 = vsel %vm1246, %v1182, %v1081
        %v1275 = vsel %vm1246, %v1166, %v1082
        %v1276 = vsel %vm1247, %v1183, %v1083
        %v1277 = vsel %vm1247, %v1167, %v1084
        %v1278 = vsel %vm1248, %v1184, %v1085
        %v1279 = vsel %vm1248, %v1168, %v1086
        %v1280 = vsel %vm1249, %v1185, %v1087
        %v1281 = vsel %vm1249, %v1169, %v1088
        %1282 = vrot.lane.b32.xlu0 %v1250, 8
        %v1283 = vpop.permute.xlu0 %1282
        %1284 = vrot.lane.b32.xlu0 %v1252, 8
        %v1285 = vpop.permute.xlu0 %1284
        %1286 = vrot.lane.b32.xlu0 %v1254, 8
        %v1287 = vpop.permute.xlu0 %1286
        %1288 = vrot.lane.b32.xlu0 %v1256, 8
        %v1289 = vpop.permute.xlu0 %1288
        %1290 = vrot.lane.b32.xlu0 %v1258, 8
        %v1291 = vpop.permute.xlu0 %1290
        %1292 = vrot.lane.b32.xlu0 %v1260, 8
        %v1293 = vpop.permute.xlu0 %1292
        %1294 = vrot.lane.b32.xlu0 %v1262, 8
        %v1295 = vpop.permute.xlu0 %1294
        %1296 = vrot.lane.b32.xlu0 %v1264, 8
        %v1297 = vpop.permute.xlu0 %1296
        %1298 = vrot.lane.b32.xlu0 %v1266, 8
        %v1299 = vpop.permute.xlu0 %1298
        %1300 = vrot.lane.b32.xlu0 %v1268, 8
        %v1301 = vpop.permute.xlu0 %1300
        %1302 = vrot.lane.b32.xlu0 %v1270, 8
        %v1303 = vpop.permute.xlu0 %1302
        %1304 = vrot.lane.b32.xlu0 %v1272, 8
        %v1305 = vpop.permute.xlu0 %1304
        %1306 = vrot.lane.b32.xlu0 %v1274, 8
        %v1307 = vpop.permute.xlu0 %1306
        %1308 = vrot.lane.b32.xlu0 %v1276, 8
        %v1309 = vpop.permute.xlu0 %1308
        %1310 = vrot.lane.b32.xlu0 %v1278, 8
        %v1311 = vpop.permute.xlu0 %1310
        %1312 = vrot.lane.b32.xlu0 %v1280, 8
        %v1313 = vpop.permute.xlu0 %1312
        %1314 = vrot.lane.b32.xlu0 %v1251, 8
        %v1315 = vpop.permute.xlu0 %1314
        %1316 = vrot.lane.b32.xlu0 %v1253, 8
        %v1317 = vpop.permute.xlu0 %1316
        %1318 = vrot.lane.b32.xlu0 %v1255, 8
        %v1319 = vpop.permute.xlu0 %1318
        %1320 = vrot.lane.b32.xlu0 %v1257, 8
        %v1321 = vpop.permute.xlu0 %1320
        %1322 = vrot.lane.b32.xlu0 %v1259, 8
        %v1323 = vpop.permute.xlu0 %1322
        %1324 = vrot.lane.b32.xlu0 %v1261, 8
        %v1325 = vpop.permute.xlu0 %1324
        %1326 = vrot.lane.b32.xlu0 %v1263, 8
        %v1327 = vpop.permute.xlu0 %1326
        %1328 = vrot.lane.b32.xlu0 %v1265, 8
        %v1329 = vpop.permute.xlu0 %1328
        %1330 = vrot.lane.b32.xlu0 %v1267, 8
        %v1331 = vpop.permute.xlu0 %1330
        %1332 = vrot.lane.b32.xlu0 %v1269, 8
        %v1333 = vpop.permute.xlu0 %1332
        %1334 = vrot.lane.b32.xlu0 %v1271, 8
        %v1335 = vpop.permute.xlu0 %1334
        %1336 = vrot.lane.b32.xlu0 %v1273, 8
        %v1337 = vpop.permute.xlu0 %1336
        %1338 = vrot.lane.b32.xlu0 %v1275, 8
        %v1339 = vpop.permute.xlu0 %1338
        %1340 = vrot.lane.b32.xlu0 %v1277, 8
        %v1341 = vpop.permute.xlu0 %1340
        %1342 = vrot.lane.b32.xlu0 %v1279, 8
        %v1343 = vpop.permute.xlu0 %1342
        %1344 = vrot.lane.b32.xlu0 %v1281, 8
        %v1345 = vpop.permute.xlu0 %1344
        %vm1346 = vcmp.lt.s32.totalorder %v766, 8
        %v1347 = vsel %vm1346, %v1283, %v1315
        %v1348 = vsel %vm1346, %v1285, %v1317
        %v1349 = vsel %vm1346, %v1287, %v1319
        %v1350 = vsel %vm1346, %v1289, %v1321
        %v1351 = vsel %vm1346, %v1291, %v1323
        %v1352 = vsel %vm1346, %v1293, %v1325
        %v1353 = vsel %vm1346, %v1295, %v1327
        %v1354 = vsel %vm1346, %v1297, %v1329
        %v1355 = vsel %vm1346, %v1299, %v1331
        %v1356 = vsel %vm1346, %v1301, %v1333
        %v1357 = vsel %vm1346, %v1303, %v1335
        %v1358 = vsel %vm1346, %v1305, %v1337
        %v1359 = vsel %vm1346, %v1307, %v1339
        %v1360 = vsel %vm1346, %v1309, %v1341
        %v1361 = vsel %vm1346, %v1311, %v1343
        %v1362 = vsel %vm1346, %v1313, %v1345
        %v1363 = vsel %vm1346, %v1315, %v1283
        %v1364 = vsel %vm1346, %v1317, %v1285
        %v1365 = vsel %vm1346, %v1319, %v1287
        %v1366 = vsel %vm1346, %v1321, %v1289
        %v1367 = vsel %vm1346, %v1323, %v1291
        %v1368 = vsel %vm1346, %v1325, %v1293
        %v1369 = vsel %vm1346, %v1327, %v1295
        %v1370 = vsel %vm1346, %v1329, %v1297
        %v1371 = vsel %vm1346, %v1331, %v1299
        %v1372 = vsel %vm1346, %v1333, %v1301
        %v1373 = vsel %vm1346, %v1335, %v1303
        %v1374 = vsel %vm1346, %v1337, %v1305
        %v1375 = vsel %vm1346, %v1339, %v1307
        %v1376 = vsel %vm1346, %v1341, %v1309
        %v1377 = vsel %vm1346, %v1343, %v1311
        %v1378 = vsel %vm1346, %v1345, %v1313
        %v1379 = vand.u32 %v685, 8
        %v1380 = vand.u32 %v686, 8
        %v1381 = vand.u32 %v687, 8
        %v1382 = vand.u32 %v688, 8
        %v1383 = vand.u32 %v689, 8
        %v1384 = vand.u32 %v690, 8
        %v1385 = vand.u32 %v691, 8
        %v1386 = vand.u32 %v692, 8
        %v1387 = vand.u32 %v693, 8
        %v1388 = vand.u32 %v694, 8
        %v1389 = vand.u32 %v695, 8
        %v1390 = vand.u32 %v696, 8
        %v1391 = vand.u32 %v697, 8
        %v1392 = vand.u32 %v698, 8
        %v1393 = vand.u32 %v699, 8
        %v1394 = vand.u32 %v700, 8
        %vm1395 = vcmp.ne.s32.totalorder %v1379, 0
        %vm1396 = vcmp.ne.s32.totalorder %v1380, 0
        %vm1397 = vcmp.ne.s32.totalorder %v1381, 0
        %vm1398 = vcmp.ne.s32.totalorder %v1382, 0
        %vm1399 = vcmp.ne.s32.totalorder %v1383, 0
        %vm1400 = vcmp.ne.s32.totalorder %v1384, 0
        %vm1401 = vcmp.ne.s32.totalorder %v1385, 0
        %vm1402 = vcmp.ne.s32.totalorder %v1386, 0
        %vm1403 = vcmp.ne.s32.totalorder %v1387, 0
        %vm1404 = vcmp.ne.s32.totalorder %v1388, 0
        %vm1405 = vcmp.ne.s32.totalorder %v1389, 0
        %vm1406 = vcmp.ne.s32.totalorder %v1390, 0
        %vm1407 = vcmp.ne.s32.totalorder %v1391, 0
        %vm1408 = vcmp.ne.s32.totalorder %v1392, 0
        %vm1409 = vcmp.ne.s32.totalorder %v1393, 0
        %vm1410 = vcmp.ne.s32.totalorder %v1394, 0
        %v1411 = vsel %vm1395, 1, 0
        %v1412 = vsel %vm1396, 1, 0
        %v1413 = vsel %vm1397, 1, 0
        %v1414 = vsel %vm1398, 1, 0
        %v1415 = vsel %vm1399, 1, 0
        %v1416 = vsel %vm1400, 1, 0
        %v1417 = vsel %vm1401, 1, 0
        %v1418 = vsel %vm1402, 1, 0
        %v1419 = vsel %vm1403, 1, 0
        %v1420 = vsel %vm1404, 1, 0
        %v1421 = vsel %vm1405, 1, 0
        %v1422 = vsel %vm1406, 1, 0
        %v1423 = vsel %vm1407, 1, 0
        %v1424 = vsel %vm1408, 1, 0
        %v1425 = vsel %vm1409, 1, 0
        %v1426 = vsel %vm1410, 1, 0
        %vm1427 = vcmp.eq.s32.totalorder %v1411, 1
        %vm1428 = vcmp.eq.s32.totalorder %v1412, 1
        %vm1429 = vcmp.eq.s32.totalorder %v1413, 1
        %vm1430 = vcmp.eq.s32.totalorder %v1414, 1
        %vm1431 = vcmp.eq.s32.totalorder %v1415, 1
        %vm1432 = vcmp.eq.s32.totalorder %v1416, 1
        %vm1433 = vcmp.eq.s32.totalorder %v1417, 1
        %vm1434 = vcmp.eq.s32.totalorder %v1418, 1
        %vm1435 = vcmp.eq.s32.totalorder %v1419, 1
        %vm1436 = vcmp.eq.s32.totalorder %v1420, 1
        %vm1437 = vcmp.eq.s32.totalorder %v1421, 1
        %vm1438 = vcmp.eq.s32.totalorder %v1422, 1
        %vm1439 = vcmp.eq.s32.totalorder %v1423, 1
        %vm1440 = vcmp.eq.s32.totalorder %v1424, 1
        %vm1441 = vcmp.eq.s32.totalorder %v1425, 1
        %vm1442 = vcmp.eq.s32.totalorder %v1426, 1
        %v1443 = vsel %vm1427, %v1363, %v1250
        %v1444 = vsel %vm1427, %v1347, %v1251
        %v1445 = vsel %vm1428, %v1364, %v1252
        %v1446 = vsel %vm1428, %v1348, %v1253
        %v1447 = vsel %vm1429, %v1365, %v1254
        %v1448 = vsel %vm1429, %v1349, %v1255
        %v1449 = vsel %vm1430, %v1366, %v1256
        %v1450 = vsel %vm1430, %v1350, %v1257
        %v1451 = vsel %vm1431, %v1367, %v1258
        %v1452 = vsel %vm1431, %v1351, %v1259
        %v1453 = vsel %vm1432, %v1368, %v1260
        %v1454 = vsel %vm1432, %v1352, %v1261
        %v1455 = vsel %vm1433, %v1369, %v1262
        %v1456 = vsel %vm1433, %v1353, %v1263
        %v1457 = vsel %vm1434, %v1370, %v1264
        %v1458 = vsel %vm1434, %v1354, %v1265
        %v1459 = vsel %vm1435, %v1371, %v1266
        %v1460 = vsel %vm1435, %v1355, %v1267
        %v1461 = vsel %vm1436, %v1372, %v1268
        %v1462 = vsel %vm1436, %v1356, %v1269
        %v1463 = vsel %vm1437, %v1373, %v1270
        %v1464 = vsel %vm1437, %v1357, %v1271
        %v1465 = vsel %vm1438, %v1374, %v1272
        %v1466 = vsel %vm1438, %v1358, %v1273
        %v1467 = vsel %vm1439, %v1375, %v1274
        %v1468 = vsel %vm1439, %v1359, %v1275
        %v1469 = vsel %vm1440, %v1376, %v1276
        %v1470 = vsel %vm1440, %v1360, %v1277
        %v1471 = vsel %vm1441, %v1377, %v1278
        %v1472 = vsel %vm1441, %v1361, %v1279
        %v1473 = vsel %vm1442, %v1378, %v1280
        %v1474 = vsel %vm1442, %v1362, %v1281
        %1475 = vrot.lane.b32.xlu0 %v1443, 16
        %v1476 = vpop.permute.xlu0 %1475
        %1477 = vrot.lane.b32.xlu0 %v1445, 16
        %v1478 = vpop.permute.xlu0 %1477
        %1479 = vrot.lane.b32.xlu0 %v1447, 16
        %v1480 = vpop.permute.xlu0 %1479
        %1481 = vrot.lane.b32.xlu0 %v1449, 16
        %v1482 = vpop.permute.xlu0 %1481
        %1483 = vrot.lane.b32.xlu0 %v1451, 16
        %v1484 = vpop.permute.xlu0 %1483
        %1485 = vrot.lane.b32.xlu0 %v1453, 16
        %v1486 = vpop.permute.xlu0 %1485
        %1487 = vrot.lane.b32.xlu0 %v1455, 16
        %v1488 = vpop.permute.xlu0 %1487
        %1489 = vrot.lane.b32.xlu0 %v1457, 16
        %v1490 = vpop.permute.xlu0 %1489
        %1491 = vrot.lane.b32.xlu0 %v1459, 16
        %v1492 = vpop.permute.xlu0 %1491
        %1493 = vrot.lane.b32.xlu0 %v1461, 16
        %v1494 = vpop.permute.xlu0 %1493
        %1495 = vrot.lane.b32.xlu0 %v1463, 16
        %v1496 = vpop.permute.xlu0 %1495
        %1497 = vrot.lane.b32.xlu0 %v1465, 16
        %v1498 = vpop.permute.xlu0 %1497
        %1499 = vrot.lane.b32.xlu0 %v1467, 16
        %v1500 = vpop.permute.xlu0 %1499
        %1501 = vrot.lane.b32.xlu0 %v1469, 16
        %v1502 = vpop.permute.xlu0 %1501
        %1503 = vrot.lane.b32.xlu0 %v1471, 16
        %v1504 = vpop.permute.xlu0 %1503
        %1505 = vrot.lane.b32.xlu0 %v1473, 16
        %v1506 = vpop.permute.xlu0 %1505
        %1507 = vrot.lane.b32.xlu0 %v1444, 16
        %v1508 = vpop.permute.xlu0 %1507
        %1509 = vrot.lane.b32.xlu0 %v1446, 16
        %v1510 = vpop.permute.xlu0 %1509
        %1511 = vrot.lane.b32.xlu0 %v1448, 16
        %v1512 = vpop.permute.xlu0 %1511
        %1513 = vrot.lane.b32.xlu0 %v1450, 16
        %v1514 = vpop.permute.xlu0 %1513
        %1515 = vrot.lane.b32.xlu0 %v1452, 16
        %v1516 = vpop.permute.xlu0 %1515
        %1517 = vrot.lane.b32.xlu0 %v1454, 16
        %v1518 = vpop.permute.xlu0 %1517
        %1519 = vrot.lane.b32.xlu0 %v1456, 16
        %v1520 = vpop.permute.xlu0 %1519
        %1521 = vrot.lane.b32.xlu0 %v1458, 16
        %v1522 = vpop.permute.xlu0 %1521
        %1523 = vrot.lane.b32.xlu0 %v1460, 16
        %v1524 = vpop.permute.xlu0 %1523
        %1525 = vrot.lane.b32.xlu0 %v1462, 16
        %v1526 = vpop.permute.xlu0 %1525
        %1527 = vrot.lane.b32.xlu0 %v1464, 16
        %v1528 = vpop.permute.xlu0 %1527
        %1529 = vrot.lane.b32.xlu0 %v1466, 16
        %v1530 = vpop.permute.xlu0 %1529
        %1531 = vrot.lane.b32.xlu0 %v1468, 16
        %v1532 = vpop.permute.xlu0 %1531
        %1533 = vrot.lane.b32.xlu0 %v1470, 16
        %v1534 = vpop.permute.xlu0 %1533
        %1535 = vrot.lane.b32.xlu0 %v1472, 16
        %v1536 = vpop.permute.xlu0 %1535
        %1537 = vrot.lane.b32.xlu0 %v1474, 16
        %v1538 = vpop.permute.xlu0 %1537
        %vm1539 = vcmp.lt.s32.totalorder %v766, 16
        %v1540 = vsel %vm1539, %v1476, %v1508
        %v1541 = vsel %vm1539, %v1478, %v1510
        %v1542 = vsel %vm1539, %v1480, %v1512
        %v1543 = vsel %vm1539, %v1482, %v1514
        %v1544 = vsel %vm1539, %v1484, %v1516
        %v1545 = vsel %vm1539, %v1486, %v1518
        %v1546 = vsel %vm1539, %v1488, %v1520
        %v1547 = vsel %vm1539, %v1490, %v1522
        %v1548 = vsel %vm1539, %v1492, %v1524
        %v1549 = vsel %vm1539, %v1494, %v1526
        %v1550 = vsel %vm1539, %v1496, %v1528
        %v1551 = vsel %vm1539, %v1498, %v1530
        %v1552 = vsel %vm1539, %v1500, %v1532
        %v1553 = vsel %vm1539, %v1502, %v1534
        %v1554 = vsel %vm1539, %v1504, %v1536
        %v1555 = vsel %vm1539, %v1506, %v1538
        %v1556 = vsel %vm1539, %v1508, %v1476
        %v1557 = vsel %vm1539, %v1510, %v1478
        %v1558 = vsel %vm1539, %v1512, %v1480
        %v1559 = vsel %vm1539, %v1514, %v1482
        %v1560 = vsel %vm1539, %v1516, %v1484
        %v1561 = vsel %vm1539, %v1518, %v1486
        %v1562 = vsel %vm1539, %v1520, %v1488
        %v1563 = vsel %vm1539, %v1522, %v1490
        %v1564 = vsel %vm1539, %v1524, %v1492
        %v1565 = vsel %vm1539, %v1526, %v1494
        %v1566 = vsel %vm1539, %v1528, %v1496
        %v1567 = vsel %vm1539, %v1530, %v1498
        %v1568 = vsel %vm1539, %v1532, %v1500
        %v1569 = vsel %vm1539, %v1534, %v1502
        %v1570 = vsel %vm1539, %v1536, %v1504
        %v1571 = vsel %vm1539, %v1538, %v1506
        %v1572 = vand.u32 %v685, 16
        %v1573 = vand.u32 %v686, 16
        %v1574 = vand.u32 %v687, 16
        %v1575 = vand.u32 %v688, 16
        %v1576 = vand.u32 %v689, 16
        %v1577 = vand.u32 %v690, 16
        %v1578 = vand.u32 %v691, 16
        %v1579 = vand.u32 %v692, 16
        %v1580 = vand.u32 %v693, 16
        %v1581 = vand.u32 %v694, 16
        %v1582 = vand.u32 %v695, 16
        %v1583 = vand.u32 %v696, 16
        %v1584 = vand.u32 %v697, 16
        %v1585 = vand.u32 %v698, 16
        %v1586 = vand.u32 %v699, 16
        %v1587 = vand.u32 %v700, 16
        %vm1588 = vcmp.ne.s32.totalorder %v1572, 0
        %vm1589 = vcmp.ne.s32.totalorder %v1573, 0
        %vm1590 = vcmp.ne.s32.totalorder %v1574, 0
        %vm1591 = vcmp.ne.s32.totalorder %v1575, 0
        %vm1592 = vcmp.ne.s32.totalorder %v1576, 0
        %vm1593 = vcmp.ne.s32.totalorder %v1577, 0
        %vm1594 = vcmp.ne.s32.totalorder %v1578, 0
        %vm1595 = vcmp.ne.s32.totalorder %v1579, 0
        %vm1596 = vcmp.ne.s32.totalorder %v1580, 0
        %vm1597 = vcmp.ne.s32.totalorder %v1581, 0
        %vm1598 = vcmp.ne.s32.totalorder %v1582, 0
        %vm1599 = vcmp.ne.s32.totalorder %v1583, 0
        %vm1600 = vcmp.ne.s32.totalorder %v1584, 0
        %vm1601 = vcmp.ne.s32.totalorder %v1585, 0
        %vm1602 = vcmp.ne.s32.totalorder %v1586, 0
        %vm1603 = vcmp.ne.s32.totalorder %v1587, 0
        %v1604 = vsel %vm1588, 1, 0
        %v1605 = vsel %vm1589, 1, 0
        %v1606 = vsel %vm1590, 1, 0
        %v1607 = vsel %vm1591, 1, 0
        %v1608 = vsel %vm1592, 1, 0
        %v1609 = vsel %vm1593, 1, 0
        %v1610 = vsel %vm1594, 1, 0
        %v1611 = vsel %vm1595, 1, 0
        %v1612 = vsel %vm1596, 1, 0
        %v1613 = vsel %vm1597, 1, 0
        %v1614 = vsel %vm1598, 1, 0
        %v1615 = vsel %vm1599, 1, 0
        %v1616 = vsel %vm1600, 1, 0
        %v1617 = vsel %vm1601, 1, 0
        %v1618 = vsel %vm1602, 1, 0
        %v1619 = vsel %vm1603, 1, 0
        %vm1620 = vcmp.eq.s32.totalorder %v1604, 1
        %vm1621 = vcmp.eq.s32.totalorder %v1605, 1
        %vm1622 = vcmp.eq.s32.totalorder %v1606, 1
        %vm1623 = vcmp.eq.s32.totalorder %v1607, 1
        %vm1624 = vcmp.eq.s32.totalorder %v1608, 1
        %vm1625 = vcmp.eq.s32.totalorder %v1609, 1
        %vm1626 = vcmp.eq.s32.totalorder %v1610, 1
        %vm1627 = vcmp.eq.s32.totalorder %v1611, 1
        %vm1628 = vcmp.eq.s32.totalorder %v1612, 1
        %vm1629 = vcmp.eq.s32.totalorder %v1613, 1
        %vm1630 = vcmp.eq.s32.totalorder %v1614, 1
        %vm1631 = vcmp.eq.s32.totalorder %v1615, 1
        %vm1632 = vcmp.eq.s32.totalorder %v1616, 1
        %vm1633 = vcmp.eq.s32.totalorder %v1617, 1
        %vm1634 = vcmp.eq.s32.totalorder %v1618, 1
        %vm1635 = vcmp.eq.s32.totalorder %v1619, 1
        %v1636 = vsel %vm1620, %v1556, %v1443
        %v1637 = vsel %vm1620, %v1540, %v1444
        %v1638 = vsel %vm1621, %v1557, %v1445
        %v1639 = vsel %vm1621, %v1541, %v1446
        %v1640 = vsel %vm1622, %v1558, %v1447
        %v1641 = vsel %vm1622, %v1542, %v1448
        %v1642 = vsel %vm1623, %v1559, %v1449
        %v1643 = vsel %vm1623, %v1543, %v1450
        %v1644 = vsel %vm1624, %v1560, %v1451
        %v1645 = vsel %vm1624, %v1544, %v1452
        %v1646 = vsel %vm1625, %v1561, %v1453
        %v1647 = vsel %vm1625, %v1545, %v1454
        %v1648 = vsel %vm1626, %v1562, %v1455
        %v1649 = vsel %vm1626, %v1546, %v1456
        %v1650 = vsel %vm1627, %v1563, %v1457
        %v1651 = vsel %vm1627, %v1547, %v1458
        %v1652 = vsel %vm1628, %v1564, %v1459
        %v1653 = vsel %vm1628, %v1548, %v1460
        %v1654 = vsel %vm1629, %v1565, %v1461
        %v1655 = vsel %vm1629, %v1549, %v1462
        %v1656 = vsel %vm1630, %v1566, %v1463
        %v1657 = vsel %vm1630, %v1550, %v1464
        %v1658 = vsel %vm1631, %v1567, %v1465
        %v1659 = vsel %vm1631, %v1551, %v1466
        %v1660 = vsel %vm1632, %v1568, %v1467
        %v1661 = vsel %vm1632, %v1552, %v1468
        %v1662 = vsel %vm1633, %v1569, %v1469
        %v1663 = vsel %vm1633, %v1553, %v1470
        %v1664 = vsel %vm1634, %v1570, %v1471
        %v1665 = vsel %vm1634, %v1554, %v1472
        %v1666 = vsel %vm1635, %v1571, %v1473
        %v1667 = vsel %vm1635, %v1555, %v1474
        %1668 = vrot.lane.b32.xlu0 %v1636, 32
        %v1669 = vpop.permute.xlu0 %1668
        %1670 = vrot.lane.b32.xlu0 %v1638, 32
        %v1671 = vpop.permute.xlu0 %1670
        %1672 = vrot.lane.b32.xlu0 %v1640, 32
        %v1673 = vpop.permute.xlu0 %1672
        %1674 = vrot.lane.b32.xlu0 %v1642, 32
        %v1675 = vpop.permute.xlu0 %1674
        %1676 = vrot.lane.b32.xlu0 %v1644, 32
        %v1677 = vpop.permute.xlu0 %1676
        %1678 = vrot.lane.b32.xlu0 %v1646, 32
        %v1679 = vpop.permute.xlu0 %1678
        %1680 = vrot.lane.b32.xlu0 %v1648, 32
        %v1681 = vpop.permute.xlu0 %1680
        %1682 = vrot.lane.b32.xlu0 %v1650, 32
        %v1683 = vpop.permute.xlu0 %1682
        %1684 = vrot.lane.b32.xlu0 %v1652, 32
        %v1685 = vpop.permute.xlu0 %1684
        %1686 = vrot.lane.b32.xlu0 %v1654, 32
        %v1687 = vpop.permute.xlu0 %1686
        %1688 = vrot.lane.b32.xlu0 %v1656, 32
        %v1689 = vpop.permute.xlu0 %1688
        %1690 = vrot.lane.b32.xlu0 %v1658, 32
        %v1691 = vpop.permute.xlu0 %1690
        %1692 = vrot.lane.b32.xlu0 %v1660, 32
        %v1693 = vpop.permute.xlu0 %1692
        %1694 = vrot.lane.b32.xlu0 %v1662, 32
        %v1695 = vpop.permute.xlu0 %1694
        %1696 = vrot.lane.b32.xlu0 %v1664, 32
        %v1697 = vpop.permute.xlu0 %1696
        %1698 = vrot.lane.b32.xlu0 %v1666, 32
        %v1699 = vpop.permute.xlu0 %1698
        %1700 = vrot.lane.b32.xlu0 %v1637, 32
        %v1701 = vpop.permute.xlu0 %1700
        %1702 = vrot.lane.b32.xlu0 %v1639, 32
        %v1703 = vpop.permute.xlu0 %1702
        %1704 = vrot.lane.b32.xlu0 %v1641, 32
        %v1705 = vpop.permute.xlu0 %1704
        %1706 = vrot.lane.b32.xlu0 %v1643, 32
        %v1707 = vpop.permute.xlu0 %1706
        %1708 = vrot.lane.b32.xlu0 %v1645, 32
        %v1709 = vpop.permute.xlu0 %1708
        %1710 = vrot.lane.b32.xlu0 %v1647, 32
        %v1711 = vpop.permute.xlu0 %1710
        %1712 = vrot.lane.b32.xlu0 %v1649, 32
        %v1713 = vpop.permute.xlu0 %1712
        %1714 = vrot.lane.b32.xlu0 %v1651, 32
        %v1715 = vpop.permute.xlu0 %1714
        %1716 = vrot.lane.b32.xlu0 %v1653, 32
        %v1717 = vpop.permute.xlu0 %1716
        %1718 = vrot.lane.b32.xlu0 %v1655, 32
        %v1719 = vpop.permute.xlu0 %1718
        %1720 = vrot.lane.b32.xlu0 %v1657, 32
        %v1721 = vpop.permute.xlu0 %1720
        %1722 = vrot.lane.b32.xlu0 %v1659, 32
        %v1723 = vpop.permute.xlu0 %1722
        %1724 = vrot.lane.b32.xlu0 %v1661, 32
        %v1725 = vpop.permute.xlu0 %1724
        %1726 = vrot.lane.b32.xlu0 %v1663, 32
        %v1727 = vpop.permute.xlu0 %1726
        %1728 = vrot.lane.b32.xlu0 %v1665, 32
        %v1729 = vpop.permute.xlu0 %1728
        %1730 = vrot.lane.b32.xlu0 %v1667, 32
        %v1731 = vpop.permute.xlu0 %1730
        %vm1732 = vcmp.lt.s32.totalorder %v766, 32
        %v1733 = vsel %vm1732, %v1669, %v1701
        %v1734 = vsel %vm1732, %v1671, %v1703
        %v1735 = vsel %vm1732, %v1673, %v1705
        %v1736 = vsel %vm1732, %v1675, %v1707
        %v1737 = vsel %vm1732, %v1677, %v1709
        %v1738 = vsel %vm1732, %v1679, %v1711
        %v1739 = vsel %vm1732, %v1681, %v1713
        %v1740 = vsel %vm1732, %v1683, %v1715
        %v1741 = vsel %vm1732, %v1685, %v1717
        %v1742 = vsel %vm1732, %v1687, %v1719
        %v1743 = vsel %vm1732, %v1689, %v1721
        %v1744 = vsel %vm1732, %v1691, %v1723
        %v1745 = vsel %vm1732, %v1693, %v1725
        %v1746 = vsel %vm1732, %v1695, %v1727
        %v1747 = vsel %vm1732, %v1697, %v1729
        %v1748 = vsel %vm1732, %v1699, %v1731
        %v1749 = vsel %vm1732, %v1701, %v1669
        %v1750 = vsel %vm1732, %v1703, %v1671
        %v1751 = vsel %vm1732, %v1705, %v1673
        %v1752 = vsel %vm1732, %v1707, %v1675
        %v1753 = vsel %vm1732, %v1709, %v1677
        %v1754 = vsel %vm1732, %v1711, %v1679
        %v1755 = vsel %vm1732, %v1713, %v1681
        %v1756 = vsel %vm1732, %v1715, %v1683
        %v1757 = vsel %vm1732, %v1717, %v1685
        %v1758 = vsel %vm1732, %v1719, %v1687
        %v1759 = vsel %vm1732, %v1721, %v1689
        %v1760 = vsel %vm1732, %v1723, %v1691
        %v1761 = vsel %vm1732, %v1725, %v1693
        %v1762 = vsel %vm1732, %v1727, %v1695
        %v1763 = vsel %vm1732, %v1729, %v1697
        %v1764 = vsel %vm1732, %v1731, %v1699
        %v1765 = vand.u32 %v685, 32
        %v1766 = vand.u32 %v686, 32
        %v1767 = vand.u32 %v687, 32
        %v1768 = vand.u32 %v688, 32
        %v1769 = vand.u32 %v689, 32
        %v1770 = vand.u32 %v690, 32
        %v1771 = vand.u32 %v691, 32
        %v1772 = vand.u32 %v692, 32
        %v1773 = vand.u32 %v693, 32
        %v1774 = vand.u32 %v694, 32
        %v1775 = vand.u32 %v695, 32
        %v1776 = vand.u32 %v696, 32
        %v1777 = vand.u32 %v697, 32
        %v1778 = vand.u32 %v698, 32
        %v1779 = vand.u32 %v699, 32
        %v1780 = vand.u32 %v700, 32
        %vm1781 = vcmp.ne.s32.totalorder %v1765, 0
        %vm1782 = vcmp.ne.s32.totalorder %v1766, 0
        %vm1783 = vcmp.ne.s32.totalorder %v1767, 0
        %vm1784 = vcmp.ne.s32.totalorder %v1768, 0
        %vm1785 = vcmp.ne.s32.totalorder %v1769, 0
        %vm1786 = vcmp.ne.s32.totalorder %v1770, 0
        %vm1787 = vcmp.ne.s32.totalorder %v1771, 0
        %vm1788 = vcmp.ne.s32.totalorder %v1772, 0
        %vm1789 = vcmp.ne.s32.totalorder %v1773, 0
        %vm1790 = vcmp.ne.s32.totalorder %v1774, 0
        %vm1791 = vcmp.ne.s32.totalorder %v1775, 0
        %vm1792 = vcmp.ne.s32.totalorder %v1776, 0
        %vm1793 = vcmp.ne.s32.totalorder %v1777, 0
        %vm1794 = vcmp.ne.s32.totalorder %v1778, 0
        %vm1795 = vcmp.ne.s32.totalorder %v1779, 0
        %vm1796 = vcmp.ne.s32.totalorder %v1780, 0
        %v1797 = vsel %vm1781, 1, 0
        %v1798 = vsel %vm1782, 1, 0
        %v1799 = vsel %vm1783, 1, 0
        %v1800 = vsel %vm1784, 1, 0
        %v1801 = vsel %vm1785, 1, 0
        %v1802 = vsel %vm1786, 1, 0
        %v1803 = vsel %vm1787, 1, 0
        %v1804 = vsel %vm1788, 1, 0
        %v1805 = vsel %vm1789, 1, 0
        %v1806 = vsel %vm1790, 1, 0
        %v1807 = vsel %vm1791, 1, 0
        %v1808 = vsel %vm1792, 1, 0
        %v1809 = vsel %vm1793, 1, 0
        %v1810 = vsel %vm1794, 1, 0
        %v1811 = vsel %vm1795, 1, 0
        %v1812 = vsel %vm1796, 1, 0
        %vm1813 = vcmp.eq.s32.totalorder %v1797, 1
        %vm1814 = vcmp.eq.s32.totalorder %v1798, 1
        %vm1815 = vcmp.eq.s32.totalorder %v1799, 1
        %vm1816 = vcmp.eq.s32.totalorder %v1800, 1
        %vm1817 = vcmp.eq.s32.totalorder %v1801, 1
        %vm1818 = vcmp.eq.s32.totalorder %v1802, 1
        %vm1819 = vcmp.eq.s32.totalorder %v1803, 1
        %vm1820 = vcmp.eq.s32.totalorder %v1804, 1
        %vm1821 = vcmp.eq.s32.totalorder %v1805, 1
        %vm1822 = vcmp.eq.s32.totalorder %v1806, 1
        %vm1823 = vcmp.eq.s32.totalorder %v1807, 1
        %vm1824 = vcmp.eq.s32.totalorder %v1808, 1
        %vm1825 = vcmp.eq.s32.totalorder %v1809, 1
        %vm1826 = vcmp.eq.s32.totalorder %v1810, 1
        %vm1827 = vcmp.eq.s32.totalorder %v1811, 1
        %vm1828 = vcmp.eq.s32.totalorder %v1812, 1
        %v1829 = vsel %vm1813, %v1749, %v1636
        %v1830 = vsel %vm1813, %v1733, %v1637
        %v1831 = vsel %vm1814, %v1750, %v1638
        %v1832 = vsel %vm1814, %v1734, %v1639
        %v1833 = vsel %vm1815, %v1751, %v1640
        %v1834 = vsel %vm1815, %v1735, %v1641
        %v1835 = vsel %vm1816, %v1752, %v1642
        %v1836 = vsel %vm1816, %v1736, %v1643
        %v1837 = vsel %vm1817, %v1753, %v1644
        %v1838 = vsel %vm1817, %v1737, %v1645
        %v1839 = vsel %vm1818, %v1754, %v1646
        %v1840 = vsel %vm1818, %v1738, %v1647
        %v1841 = vsel %vm1819, %v1755, %v1648
        %v1842 = vsel %vm1819, %v1739, %v1649
        %v1843 = vsel %vm1820, %v1756, %v1650
        %v1844 = vsel %vm1820, %v1740, %v1651
        %v1845 = vsel %vm1821, %v1757, %v1652
        %v1846 = vsel %vm1821, %v1741, %v1653
        %v1847 = vsel %vm1822, %v1758, %v1654
        %v1848 = vsel %vm1822, %v1742, %v1655
        %v1849 = vsel %vm1823, %v1759, %v1656
        %v1850 = vsel %vm1823, %v1743, %v1657
        %v1851 = vsel %vm1824, %v1760, %v1658
        %v1852 = vsel %vm1824, %v1744, %v1659
        %v1853 = vsel %vm1825, %v1761, %v1660
        %v1854 = vsel %vm1825, %v1745, %v1661
        %v1855 = vsel %vm1826, %v1762, %v1662
        %v1856 = vsel %vm1826, %v1746, %v1663
        %v1857 = vsel %vm1827, %v1763, %v1664
        %v1858 = vsel %vm1827, %v1747, %v1665
        %v1859 = vsel %vm1828, %v1764, %v1666
        %v1860 = vsel %vm1828, %v1748, %v1667
        %1861 = vrot.lane.b32.xlu0 %v1829, 64
        %v1862 = vpop.permute.xlu0 %1861
        %1863 = vrot.lane.b32.xlu0 %v1831, 64
        %v1864 = vpop.permute.xlu0 %1863
        %1865 = vrot.lane.b32.xlu0 %v1833, 64
        %v1866 = vpop.permute.xlu0 %1865
        %1867 = vrot.lane.b32.xlu0 %v1835, 64
        %v1868 = vpop.permute.xlu0 %1867
        %1869 = vrot.lane.b32.xlu0 %v1837, 64
        %v1870 = vpop.permute.xlu0 %1869
        %1871 = vrot.lane.b32.xlu0 %v1839, 64
        %v1872 = vpop.permute.xlu0 %1871
        %1873 = vrot.lane.b32.xlu0 %v1841, 64
        %v1874 = vpop.permute.xlu0 %1873
        %1875 = vrot.lane.b32.xlu0 %v1843, 64
        %v1876 = vpop.permute.xlu0 %1875
        %1877 = vrot.lane.b32.xlu0 %v1845, 64
        %v1878 = vpop.permute.xlu0 %1877
        %1879 = vrot.lane.b32.xlu0 %v1847, 64
        %v1880 = vpop.permute.xlu0 %1879
        %1881 = vrot.lane.b32.xlu0 %v1849, 64
        %v1882 = vpop.permute.xlu0 %1881
        %1883 = vrot.lane.b32.xlu0 %v1851, 64
        %v1884 = vpop.permute.xlu0 %1883
        %1885 = vrot.lane.b32.xlu0 %v1853, 64
        %v1886 = vpop.permute.xlu0 %1885
        %1887 = vrot.lane.b32.xlu0 %v1855, 64
        %v1888 = vpop.permute.xlu0 %1887
        %1889 = vrot.lane.b32.xlu0 %v1857, 64
        %v1890 = vpop.permute.xlu0 %1889
        %1891 = vrot.lane.b32.xlu0 %v1859, 64
        %v1892 = vpop.permute.xlu0 %1891
        %1893 = vrot.lane.b32.xlu0 %v1830, 64
        %v1894 = vpop.permute.xlu0 %1893
        %1895 = vrot.lane.b32.xlu0 %v1832, 64
        %v1896 = vpop.permute.xlu0 %1895
        %1897 = vrot.lane.b32.xlu0 %v1834, 64
        %v1898 = vpop.permute.xlu0 %1897
        %1899 = vrot.lane.b32.xlu0 %v1836, 64
        %v1900 = vpop.permute.xlu0 %1899
        %1901 = vrot.lane.b32.xlu0 %v1838, 64
        %v1902 = vpop.permute.xlu0 %1901
        %1903 = vrot.lane.b32.xlu0 %v1840, 64
        %v1904 = vpop.permute.xlu0 %1903
        %1905 = vrot.lane.b32.xlu0 %v1842, 64
        %v1906 = vpop.permute.xlu0 %1905
        %1907 = vrot.lane.b32.xlu0 %v1844, 64
        %v1908 = vpop.permute.xlu0 %1907
        %1909 = vrot.lane.b32.xlu0 %v1846, 64
        %v1910 = vpop.permute.xlu0 %1909
        %1911 = vrot.lane.b32.xlu0 %v1848, 64
        %v1912 = vpop.permute.xlu0 %1911
        %1913 = vrot.lane.b32.xlu0 %v1850, 64
        %v1914 = vpop.permute.xlu0 %1913
        %1915 = vrot.lane.b32.xlu0 %v1852, 64
        %v1916 = vpop.permute.xlu0 %1915
        %1917 = vrot.lane.b32.xlu0 %v1854, 64
        %v1918 = vpop.permute.xlu0 %1917
        %1919 = vrot.lane.b32.xlu0 %v1856, 64
        %v1920 = vpop.permute.xlu0 %1919
        %1921 = vrot.lane.b32.xlu0 %v1858, 64
        %v1922 = vpop.permute.xlu0 %1921
        %1923 = vrot.lane.b32.xlu0 %v1860, 64
        %v1924 = vpop.permute.xlu0 %1923
        %vm1925 = vcmp.lt.s32.totalorder %v766, 64
        %v1926 = vsel %vm1925, %v1862, %v1894
        %v1927 = vsel %vm1925, %v1864, %v1896
        %v1928 = vsel %vm1925, %v1866, %v1898
        %v1929 = vsel %vm1925, %v1868, %v1900
        %v1930 = vsel %vm1925, %v1870, %v1902
        %v1931 = vsel %vm1925, %v1872, %v1904
        %v1932 = vsel %vm1925, %v1874, %v1906
        %v1933 = vsel %vm1925, %v1876, %v1908
        %v1934 = vsel %vm1925, %v1878, %v1910
        %v1935 = vsel %vm1925, %v1880, %v1912
        %v1936 = vsel %vm1925, %v1882, %v1914
        %v1937 = vsel %vm1925, %v1884, %v1916
        %v1938 = vsel %vm1925, %v1886, %v1918
        %v1939 = vsel %vm1925, %v1888, %v1920
        %v1940 = vsel %vm1925, %v1890, %v1922
        %v1941 = vsel %vm1925, %v1892, %v1924
        %v1942 = vsel %vm1925, %v1894, %v1862
        %v1943 = vsel %vm1925, %v1896, %v1864
        %v1944 = vsel %vm1925, %v1898, %v1866
        %v1945 = vsel %vm1925, %v1900, %v1868
        %v1946 = vsel %vm1925, %v1902, %v1870
        %v1947 = vsel %vm1925, %v1904, %v1872
        %v1948 = vsel %vm1925, %v1906, %v1874
        %v1949 = vsel %vm1925, %v1908, %v1876
        %v1950 = vsel %vm1925, %v1910, %v1878
        %v1951 = vsel %vm1925, %v1912, %v1880
        %v1952 = vsel %vm1925, %v1914, %v1882
        %v1953 = vsel %vm1925, %v1916, %v1884
        %v1954 = vsel %vm1925, %v1918, %v1886
        %v1955 = vsel %vm1925, %v1920, %v1888
        %v1956 = vsel %vm1925, %v1922, %v1890
        %v1957 = vsel %vm1925, %v1924, %v1892
        %v1958 = vand.u32 %v685, 64
        %v1959 = vand.u32 %v686, 64
        %v1960 = vand.u32 %v687, 64
        %v1961 = vand.u32 %v688, 64
        %v1962 = vand.u32 %v689, 64
        %v1963 = vand.u32 %v690, 64
        %v1964 = vand.u32 %v691, 64
        %v1965 = vand.u32 %v692, 64
        %v1966 = vand.u32 %v693, 64
        %v1967 = vand.u32 %v694, 64
        %v1968 = vand.u32 %v695, 64
        %v1969 = vand.u32 %v696, 64
        %v1970 = vand.u32 %v697, 64
        %v1971 = vand.u32 %v698, 64
        %v1972 = vand.u32 %v699, 64
        %v1973 = vand.u32 %v700, 64
        %vm1974 = vcmp.ne.s32.totalorder %v1958, 0
        %vm1975 = vcmp.ne.s32.totalorder %v1959, 0
        %vm1976 = vcmp.ne.s32.totalorder %v1960, 0
        %vm1977 = vcmp.ne.s32.totalorder %v1961, 0
        %vm1978 = vcmp.ne.s32.totalorder %v1962, 0
        %vm1979 = vcmp.ne.s32.totalorder %v1963, 0
        %vm1980 = vcmp.ne.s32.totalorder %v1964, 0
        %vm1981 = vcmp.ne.s32.totalorder %v1965, 0
        %vm1982 = vcmp.ne.s32.totalorder %v1966, 0
        %vm1983 = vcmp.ne.s32.totalorder %v1967, 0
        %vm1984 = vcmp.ne.s32.totalorder %v1968, 0
        %vm1985 = vcmp.ne.s32.totalorder %v1969, 0
        %vm1986 = vcmp.ne.s32.totalorder %v1970, 0
        %vm1987 = vcmp.ne.s32.totalorder %v1971, 0
        %vm1988 = vcmp.ne.s32.totalorder %v1972, 0
        %vm1989 = vcmp.ne.s32.totalorder %v1973, 0
        %v1990 = vsel %vm1974, 1, 0
        %v1991 = vsel %vm1975, 1, 0
        %v1992 = vsel %vm1976, 1, 0
        %v1993 = vsel %vm1977, 1, 0
        %v1994 = vsel %vm1978, 1, 0
        %v1995 = vsel %vm1979, 1, 0
        %v1996 = vsel %vm1980, 1, 0
        %v1997 = vsel %vm1981, 1, 0
        %v1998 = vsel %vm1982, 1, 0
        %v1999 = vsel %vm1983, 1, 0
        %v2000 = vsel %vm1984, 1, 0
        %v2001 = vsel %vm1985, 1, 0
        %v2002 = vsel %vm1986, 1, 0
        %v2003 = vsel %vm1987, 1, 0
        %v2004 = vsel %vm1988, 1, 0
        %v2005 = vsel %vm1989, 1, 0
        %vm2006 = vcmp.eq.s32.totalorder %v1990, 1
        %vm2007 = vcmp.eq.s32.totalorder %v1991, 1
        %vm2008 = vcmp.eq.s32.totalorder %v1992, 1
        %vm2009 = vcmp.eq.s32.totalorder %v1993, 1
        %vm2010 = vcmp.eq.s32.totalorder %v1994, 1
        %vm2011 = vcmp.eq.s32.totalorder %v1995, 1
        %vm2012 = vcmp.eq.s32.totalorder %v1996, 1
        %vm2013 = vcmp.eq.s32.totalorder %v1997, 1
        %vm2014 = vcmp.eq.s32.totalorder %v1998, 1
        %vm2015 = vcmp.eq.s32.totalorder %v1999, 1
        %vm2016 = vcmp.eq.s32.totalorder %v2000, 1
        %vm2017 = vcmp.eq.s32.totalorder %v2001, 1
        %vm2018 = vcmp.eq.s32.totalorder %v2002, 1
        %vm2019 = vcmp.eq.s32.totalorder %v2003, 1
        %vm2020 = vcmp.eq.s32.totalorder %v2004, 1
        %vm2021 = vcmp.eq.s32.totalorder %v2005, 1
        %v2022 = vsel %vm2006, %v1942, %v1829
        %v2023 = vsel %vm2006, %v1926, %v1830
        %v2024 = vsel %vm2007, %v1943, %v1831
        %v2025 = vsel %vm2007, %v1927, %v1832
        %v2026 = vsel %vm2008, %v1944, %v1833
        %v2027 = vsel %vm2008, %v1928, %v1834
        %v2028 = vsel %vm2009, %v1945, %v1835
        %v2029 = vsel %vm2009, %v1929, %v1836
        %v2030 = vsel %vm2010, %v1946, %v1837
        %v2031 = vsel %vm2010, %v1930, %v1838
        %v2032 = vsel %vm2011, %v1947, %v1839
        %v2033 = vsel %vm2011, %v1931, %v1840
        %v2034 = vsel %vm2012, %v1948, %v1841
        %v2035 = vsel %vm2012, %v1932, %v1842
        %v2036 = vsel %vm2013, %v1949, %v1843
        %v2037 = vsel %vm2013, %v1933, %v1844
        %v2038 = vsel %vm2014, %v1950, %v1845
        %v2039 = vsel %vm2014, %v1934, %v1846
        %v2040 = vsel %vm2015, %v1951, %v1847
        %v2041 = vsel %vm2015, %v1935, %v1848
        %v2042 = vsel %vm2016, %v1952, %v1849
        %v2043 = vsel %vm2016, %v1936, %v1850
        %v2044 = vsel %vm2017, %v1953, %v1851
        %v2045 = vsel %vm2017, %v1937, %v1852
        %v2046 = vsel %vm2018, %v1954, %v1853
        %v2047 = vsel %vm2018, %v1938, %v1854
        %v2048 = vsel %vm2019, %v1955, %v1855
        %v2049 = vsel %vm2019, %v1939, %v1856
        %v2050 = vsel %vm2020, %v1956, %v1857
        %v2051 = vsel %vm2020, %v1940, %v1858
        %v2052 = vsel %vm2021, %v1957, %v1859
        %v2053 = vsel %vm2021, %v1941, %v1860
        %v2086 = vunpack.c.l.b16 %v345
        %v2087 = vunpack.c.l.b16 %v346
        %v2088 = vunpack.c.l.b16 %v347
        %v2089 = vunpack.c.l.b16 %v348
        %v2090 = vunpack.c.l.b16 %v349
        %v2091 = vunpack.c.l.b16 %v350
        %v2092 = vunpack.c.l.b16 %v351
        %v2093 = vunpack.c.l.b16 %v352
        %v2094 = vunpack.c.l.b16 %v353
        %v2095 = vunpack.c.l.b16 %v354
        %v2096 = vunpack.c.l.b16 %v355
        %v2097 = vunpack.c.l.b16 %v356
        %v2098 = vunpack.c.l.b16 %v357
        %v2099 = vunpack.c.l.b16 %v358
        %v2100 = vunpack.c.l.b16 %v359
        %v2101 = vunpack.c.l.b16 %v360
        %v2102 = vunpack.c.l.b16 %v361
        %v2103 = vunpack.c.l.b16 %v362
        %v2104 = vunpack.c.l.b16 %v363
        %v2105 = vunpack.c.l.b16 %v364
        %v2106 = vunpack.c.l.b16 %v365
        %v2107 = vunpack.c.l.b16 %v366
        %v2108 = vunpack.c.l.b16 %v367
        %v2109 = vunpack.c.l.b16 %v368
        %v2110 = vunpack.c.l.b16 %v369
        %v2111 = vunpack.c.l.b16 %v370
        %v2112 = vunpack.c.l.b16 %v371
        %v2113 = vunpack.c.l.b16 %v372
        %v2114 = vunpack.c.l.b16 %v373
        %v2115 = vunpack.c.l.b16 %v374
        %v2116 = vunpack.c.l.b16 %v375
        %v2117 = vunpack.c.l.b16 %v376
        %v2118 = vpack.c.b16 %v2087, %v2086
        %v2119 = vpack.c.b16 %v2089, %v2088
        %v2120 = vpack.c.b16 %v2091, %v2090
        %v2121 = vpack.c.b16 %v2093, %v2092
        %v2122 = vpack.c.b16 %v2095, %v2094
        %v2123 = vpack.c.b16 %v2097, %v2096
        %v2124 = vpack.c.b16 %v2099, %v2098
        %v2125 = vpack.c.b16 %v2101, %v2100
        %v2126 = vpack.c.b16 %v2103, %v2102
        %v2127 = vpack.c.b16 %v2105, %v2104
        %v2128 = vpack.c.b16 %v2107, %v2106
        %v2129 = vpack.c.b16 %v2109, %v2108
        %v2130 = vpack.c.b16 %v2111, %v2110
        %v2131 = vpack.c.b16 %v2113, %v2112
        %v2132 = vpack.c.b16 %v2115, %v2114
        %v2133 = vpack.c.b16 %v2117, %v2116
        %2150 = vmatprep.subr.bf16.mxu0 0
        %2151 = vmatpush1.bf16.xpose.msra.mxu0 %v2118
        %2152 = vmatprep.subr.bf16.mxu0 0
        %2153 = vmatpush1.bf16.xpose.msra.mxu0 %v2119
        %2154 = vmatprep.subr.bf16.mxu0 0
        %2155 = vmatpush1.bf16.xpose.msra.mxu0 %v2120
        %2156 = vmatprep.subr.bf16.mxu0 0
        %2157 = vmatpush1.bf16.xpose.msra.mxu0 %v2121
        %2158 = vmatprep.subr.bf16.mxu0 0
        %2159 = vmatpush1.bf16.xpose.msra.mxu0 %v2122
        %2160 = vmatprep.subr.bf16.mxu0 0
        %2161 = vmatpush1.bf16.xpose.msra.mxu0 %v2123
        %2162 = vmatprep.subr.bf16.mxu0 0
        %2163 = vmatpush1.bf16.xpose.msra.mxu0 %v2124
        %2164 = vmatprep.subr.bf16.mxu0 0
        %2165 = vmatpush1.bf16.xpose.msra.mxu0 %v2125
        %2166 = vmatprep.subr.bf16.mxu0 0
        %2167 = vmatpush1.bf16.xpose.msra.mxu0 %v2126
        %2168 = vmatprep.subr.bf16.mxu0 0
        %2169 = vmatpush1.bf16.xpose.msra.mxu0 %v2127
        %2170 = vmatprep.subr.bf16.mxu0 0
        %2171 = vmatpush1.bf16.xpose.msra.mxu0 %v2128
        %2172 = vmatprep.subr.bf16.mxu0 0
        %2173 = vmatpush1.bf16.xpose.msra.mxu0 %v2129
        %2174 = vmatprep.subr.bf16.mxu0 0
        %2175 = vmatpush1.bf16.xpose.msra.mxu0 %v2130
        %2176 = vmatprep.subr.bf16.mxu0 0
        %2177 = vmatpush1.bf16.xpose.msra.mxu0 %v2131
        %2178 = vmatprep.subr.bf16.mxu0 0
        %2179 = vmatpush1.bf16.xpose.msra.mxu0 %v2132
        %2180 = vmatprep.subr.bf16.mxu0 0
        %2181 = vmatpush1.bf16.xpose.msra.mxu0 %v2133
        %2182 = vmatprep.mubr.bf16.mxu0 0
        %2183 = vmatmul.mubr.bf16.gmra.mrb[0].mxu0 %v457
        %v2184 = vpop.f32.mrb[0].mxu0
        %v2185 = vadd.f32 %v2022, %v2184
        %v2186 = vpop.f32.mrb[0].mxu0
        %v2187 = vadd.f32 %v2023, %v2186
        %v2188 = vpop.f32.mrb[0].mxu0
        %v2189 = vadd.f32 %v2024, %v2188
        %v2190 = vpop.f32.mrb[0].mxu0
        %v2191 = vadd.f32 %v2025, %v2190
        %2192 = vmatprep.mubr.bf16.mxu0 0
        %2193 = vmatmul.mubr.bf16.gmra.mrb[0].mxu0 %v458
        %v2194 = vpop.f32.mrb[0].mxu0
        %v2195 = vadd.f32 %v2026, %v2194
        %v2196 = vpop.f32.mrb[0].mxu0
        %v2197 = vadd.f32 %v2027, %v2196
        %v2198 = vpop.f32.mrb[0].mxu0
        %v2199 = vadd.f32 %v2028, %v2198
        %v2200 = vpop.f32.mrb[0].mxu0
        %v2201 = vadd.f32 %v2029, %v2200
        %2202 = vmatprep.mubr.bf16.mxu0 0
        %2203 = vmatmul.mubr.bf16.gmra.mrb[0].mxu0 %v459
        %v2204 = vpop.f32.mrb[0].mxu0
        %v2205 = vadd.f32 %v2030, %v2204
        %v2206 = vpop.f32.mrb[0].mxu0
        %v2207 = vadd.f32 %v2031, %v2206
        %v2208 = vpop.f32.mrb[0].mxu0
        %v2209 = vadd.f32 %v2032, %v2208
        %v2210 = vpop.f32.mrb[0].mxu0
        %v2211 = vadd.f32 %v2033, %v2210
        %2212 = vmatprep.mubr.bf16.mxu0 0
        %2213 = vmatmul.mubr.bf16.gmra.mrb[0].mxu0 %v460
        %v2214 = vpop.f32.mrb[0].mxu0
        %v2215 = vadd.f32 %v2034, %v2214
        %v2216 = vpop.f32.mrb[0].mxu0
        %v2217 = vadd.f32 %v2035, %v2216
        %v2218 = vpop.f32.mrb[0].mxu0
        %v2219 = vadd.f32 %v2036, %v2218
        %v2220 = vpop.f32.mrb[0].mxu0
        %v2221 = vadd.f32 %v2037, %v2220
        %2222 = vmatprep.mubr.bf16.mxu0 0
        %2223 = vmatmul.mubr.bf16.gmra.mrb[0].mxu0 %v461
        %v2224 = vpop.f32.mrb[0].mxu0
        %v2225 = vadd.f32 %v2038, %v2224
        %v2226 = vpop.f32.mrb[0].mxu0
        %v2227 = vadd.f32 %v2039, %v2226
        %v2228 = vpop.f32.mrb[0].mxu0
        %v2229 = vadd.f32 %v2040, %v2228
        %v2230 = vpop.f32.mrb[0].mxu0
        %v2231 = vadd.f32 %v2041, %v2230
        %2232 = vmatprep.mubr.bf16.mxu0 0
        %2233 = vmatmul.mubr.bf16.gmra.mrb[0].mxu0 %v462
        %v2234 = vpop.f32.mrb[0].mxu0
        %v2235 = vadd.f32 %v2042, %v2234
        %v2236 = vpop.f32.mrb[0].mxu0
        %v2237 = vadd.f32 %v2043, %v2236
        %v2238 = vpop.f32.mrb[0].mxu0
        %v2239 = vadd.f32 %v2044, %v2238
        %v2240 = vpop.f32.mrb[0].mxu0
        %v2241 = vadd.f32 %v2045, %v2240
        %2242 = vmatprep.mubr.bf16.mxu0 0
        %2243 = vmatmul.mubr.bf16.gmra.mrb[0].mxu0 %v463
        %v2244 = vpop.f32.mrb[0].mxu0
        %v2245 = vadd.f32 %v2046, %v2244
        %v2246 = vpop.f32.mrb[0].mxu0
        %v2247 = vadd.f32 %v2047, %v2246
        %v2248 = vpop.f32.mrb[0].mxu0
        %v2249 = vadd.f32 %v2048, %v2248
        %v2250 = vpop.f32.mrb[0].mxu0
        %v2251 = vadd.f32 %v2049, %v2250
        %2252 = vmatprep.mubr.bf16.mxu0 0
        %2253 = vmatmul.mubr.bf16.gmra.mrb[0].mxu0 %v464
        %v2254 = vpop.f32.mrb[0].mxu0
        %v2255 = vadd.f32 %v2050, %v2254
        %v2256 = vpop.f32.mrb[0].mxu0
        %v2257 = vadd.f32 %v2051, %v2256
        %v2258 = vpop.f32.mrb[0].mxu0
        %v2259 = vadd.f32 %v2052, %v2258
        %v2260 = vpop.f32.mrb[0].mxu0
        %v2261 = vadd.f32 %v2053, %v2260
        %2262 = vdwg.mxu0
        %v2263 = vmul.f32 %v2185, 0.088388346
        %v2264 = vmul.f32 %v2187, 0.088388346
        %v2265 = vmul.f32 %v2189, 0.088388346
        %v2266 = vmul.f32 %v2191, 0.088388346
        %v2267 = vmul.f32 %v2195, 0.088388346
        %v2268 = vmul.f32 %v2197, 0.088388346
        %v2269 = vmul.f32 %v2199, 0.088388346
        %v2270 = vmul.f32 %v2201, 0.088388346
        %v2271 = vmul.f32 %v2205, 0.088388346
        %v2272 = vmul.f32 %v2207, 0.088388346
        %v2273 = vmul.f32 %v2209, 0.088388346
        %v2274 = vmul.f32 %v2211, 0.088388346
        %v2275 = vmul.f32 %v2215, 0.088388346
        %v2276 = vmul.f32 %v2217, 0.088388346
        %v2277 = vmul.f32 %v2219, 0.088388346
        %v2278 = vmul.f32 %v2221, 0.088388346
        %v2279 = vmul.f32 %v2225, 0.088388346
        %v2280 = vmul.f32 %v2227, 0.088388346
        %v2281 = vmul.f32 %v2229, 0.088388346
        %v2282 = vmul.f32 %v2231, 0.088388346
        %v2283 = vmul.f32 %v2235, 0.088388346
        %v2284 = vmul.f32 %v2237, 0.088388346
        %v2285 = vmul.f32 %v2239, 0.088388346
        %v2286 = vmul.f32 %v2241, 0.088388346
        %v2287 = vmul.f32 %v2245, 0.088388346
        %v2288 = vmul.f32 %v2247, 0.088388346
        %v2289 = vmul.f32 %v2249, 0.088388346
        %v2290 = vmul.f32 %v2251, 0.088388346
        %v2291 = vmul.f32 %v2255, 0.088388346
        %v2292 = vmul.f32 %v2257, 0.088388346
        %v2293 = vmul.f32 %v2259, 0.088388346
        %v2294 = vmul.f32 %v2261, 0.088388346
        %v2295 = vadd.s32 %v766, 128
        %v2296 = vsub.s32 %v766, %v685
        %v2297 = vsub.s32 %v2295, %v685
        %v2298 = vsub.s32 %v766, %v686
        %v2299 = vsub.s32 %v2295, %v686
        %v2300 = vsub.s32 %v766, %v687
        %v2301 = vsub.s32 %v2295, %v687
        %v2302 = vsub.s32 %v766, %v688
        %v2303 = vsub.s32 %v2295, %v688
        %v2304 = vsub.s32 %v766, %v689
        %v2305 = vsub.s32 %v2295, %v689
        %v2306 = vsub.s32 %v766, %v690
        %v2307 = vsub.s32 %v2295, %v690
        %v2308 = vsub.s32 %v766, %v691
        %v2309 = vsub.s32 %v2295, %v691
        %v2310 = vsub.s32 %v766, %v692
        %v2311 = vsub.s32 %v2295, %v692
        %v2312 = vsub.s32 %v766, %v693
        %v2313 = vsub.s32 %v2295, %v693
        %v2314 = vsub.s32 %v766, %v694
        %v2315 = vsub.s32 %v2295, %v694
        %v2316 = vsub.s32 %v766, %v695
        %v2317 = vsub.s32 %v2295, %v695
        %v2318 = vsub.s32 %v766, %v696
        %v2319 = vsub.s32 %v2295, %v696
        %v2320 = vsub.s32 %v766, %v697
        %v2321 = vsub.s32 %v2295, %v697
        %v2322 = vsub.s32 %v766, %v698
        %v2323 = vsub.s32 %v2295, %v698
        %v2324 = vsub.s32 %v766, %v699
        %v2325 = vsub.s32 %v2295, %v699
        %v2326 = vsub.s32 %v766, %v700
        %v2327 = vsub.s32 %v2295, %v700
        %vm2328 = vcmp.ge.s32.totalorder %v2296, 0
        %vm2329 = vcmp.ge.s32.totalorder %v2297, 0
        %vm2330 = vcmp.ge.s32.totalorder %v2298, 0
        %vm2331 = vcmp.ge.s32.totalorder %v2299, 0
        %vm2332 = vcmp.ge.s32.totalorder %v2300, 0
        %vm2333 = vcmp.ge.s32.totalorder %v2301, 0
        %vm2334 = vcmp.ge.s32.totalorder %v2302, 0
        %vm2335 = vcmp.ge.s32.totalorder %v2303, 0
        %vm2336 = vcmp.ge.s32.totalorder %v2304, 0
        %vm2337 = vcmp.ge.s32.totalorder %v2305, 0
        %vm2338 = vcmp.ge.s32.totalorder %v2306, 0
        %vm2339 = vcmp.ge.s32.totalorder %v2307, 0
        %vm2340 = vcmp.ge.s32.totalorder %v2308, 0
        %vm2341 = vcmp.ge.s32.totalorder %v2309, 0
        %vm2342 = vcmp.ge.s32.totalorder %v2310, 0
        %vm2343 = vcmp.ge.s32.totalorder %v2311, 0
        %vm2344 = vcmp.ge.s32.totalorder %v2312, 0
        %vm2345 = vcmp.ge.s32.totalorder %v2313, 0
        %vm2346 = vcmp.ge.s32.totalorder %v2314, 0
        %vm2347 = vcmp.ge.s32.totalorder %v2315, 0
        %vm2348 = vcmp.ge.s32.totalorder %v2316, 0
        %vm2349 = vcmp.ge.s32.totalorder %v2317, 0
        %vm2350 = vcmp.ge.s32.totalorder %v2318, 0
        %vm2351 = vcmp.ge.s32.totalorder %v2319, 0
        %vm2352 = vcmp.ge.s32.totalorder %v2320, 0
        %vm2353 = vcmp.ge.s32.totalorder %v2321, 0
        %vm2354 = vcmp.ge.s32.totalorder %v2322, 0
        %vm2355 = vcmp.ge.s32.totalorder %v2323, 0
        %vm2356 = vcmp.ge.s32.totalorder %v2324, 0
        %vm2357 = vcmp.ge.s32.totalorder %v2325, 0
        %vm2358 = vcmp.ge.s32.totalorder %v2326, 0
        %vm2359 = vcmp.ge.s32.totalorder %v2327, 0
        %vm2360 = vcmp.lt.s32.totalorder %v2296, 128
        %vm2361 = vcmp.lt.s32.totalorder %v2297, 128
        %vm2362 = vcmp.lt.s32.totalorder %v2298, 128
        %vm2363 = vcmp.lt.s32.totalorder %v2299, 128
        %vm2364 = vcmp.lt.s32.totalorder %v2300, 128
        %vm2365 = vcmp.lt.s32.totalorder %v2301, 128
        %vm2366 = vcmp.lt.s32.totalorder %v2302, 128
        %vm2367 = vcmp.lt.s32.totalorder %v2303, 128
        %vm2368 = vcmp.lt.s32.totalorder %v2304, 128
        %vm2369 = vcmp.lt.s32.totalorder %v2305, 128
        %vm2370 = vcmp.lt.s32.totalorder %v2306, 128
        %vm2371 = vcmp.lt.s32.totalorder %v2307, 128
        %vm2372 = vcmp.lt.s32.totalorder %v2308, 128
        %vm2373 = vcmp.lt.s32.totalorder %v2309, 128
        %vm2374 = vcmp.lt.s32.totalorder %v2310, 128
        %vm2375 = vcmp.lt.s32.totalorder %v2311, 128
        %vm2376 = vcmp.lt.s32.totalorder %v2312, 128
        %vm2377 = vcmp.lt.s32.totalorder %v2313, 128
        %vm2378 = vcmp.lt.s32.totalorder %v2314, 128
        %vm2379 = vcmp.lt.s32.totalorder %v2315, 128
        %vm2380 = vcmp.lt.s32.totalorder %v2316, 128
        %vm2381 = vcmp.lt.s32.totalorder %v2317, 128
        %vm2382 = vcmp.lt.s32.totalorder %v2318, 128
        %vm2383 = vcmp.lt.s32.totalorder %v2319, 128
        %vm2384 = vcmp.lt.s32.totalorder %v2320, 128
        %vm2385 = vcmp.lt.s32.totalorder %v2321, 128
        %vm2386 = vcmp.lt.s32.totalorder %v2322, 128
        %vm2387 = vcmp.lt.s32.totalorder %v2323, 128
        %vm2388 = vcmp.lt.s32.totalorder %v2324, 128
        %vm2389 = vcmp.lt.s32.totalorder %v2325, 128
        %vm2390 = vcmp.lt.s32.totalorder %v2326, 128
        %vm2391 = vcmp.lt.s32.totalorder %v2327, 128
        %vm2392 = vmand %vm2328, %vm2360
        %vm2393 = vmand %vm2329, %vm2361
        %vm2394 = vmand %vm2330, %vm2362
        %vm2395 = vmand %vm2331, %vm2363
        %vm2396 = vmand %vm2332, %vm2364
        %vm2397 = vmand %vm2333, %vm2365
        %vm2398 = vmand %vm2334, %vm2366
        %vm2399 = vmand %vm2335, %vm2367
        %vm2400 = vmand %vm2336, %vm2368
        %vm2401 = vmand %vm2337, %vm2369
        %vm2402 = vmand %vm2338, %vm2370
        %vm2403 = vmand %vm2339, %vm2371
        %vm2404 = vmand %vm2340, %vm2372
        %vm2405 = vmand %vm2341, %vm2373
        %vm2406 = vmand %vm2342, %vm2374
        %vm2407 = vmand %vm2343, %vm2375
        %vm2408 = vmand %vm2344, %vm2376
        %vm2409 = vmand %vm2345, %vm2377
        %vm2410 = vmand %vm2346, %vm2378
        %vm2411 = vmand %vm2347, %vm2379
        %vm2412 = vmand %vm2348, %vm2380
        %vm2413 = vmand %vm2349, %vm2381
        %vm2414 = vmand %vm2350, %vm2382
        %vm2415 = vmand %vm2351, %vm2383
        %vm2416 = vmand %vm2352, %vm2384
        %vm2417 = vmand %vm2353, %vm2385
        %vm2418 = vmand %vm2354, %vm2386
        %vm2419 = vmand %vm2355, %vm2387
        %vm2420 = vmand %vm2356, %vm2388
        %vm2421 = vmand %vm2357, %vm2389
        %vm2422 = vmand %vm2358, %vm2390
        %vm2423 = vmand %vm2359, %vm2391
        %v2424 = vsel %vm2392, %v2263, -1e+30
        %v2425 = vsel %vm2393, %v2264, -1e+30
        %v2426 = vsel %vm2394, %v2265, -1e+30
        %v2427 = vsel %vm2395, %v2266, -1e+30
        %v2428 = vsel %vm2396, %v2267, -1e+30
        %v2429 = vsel %vm2397, %v2268, -1e+30
        %v2430 = vsel %vm2398, %v2269, -1e+30
        %v2431 = vsel %vm2399, %v2270, -1e+30
        %v2432 = vsel %vm2400, %v2271, -1e+30
        %v2433 = vsel %vm2401, %v2272, -1e+30
        %v2434 = vsel %vm2402, %v2273, -1e+30
        %v2435 = vsel %vm2403, %v2274, -1e+30
        %v2436 = vsel %vm2404, %v2275, -1e+30
        %v2437 = vsel %vm2405, %v2276, -1e+30
        %v2438 = vsel %vm2406, %v2277, -1e+30
        %v2439 = vsel %vm2407, %v2278, -1e+30
        %v2440 = vsel %vm2408, %v2279, -1e+30
        %v2441 = vsel %vm2409, %v2280, -1e+30
        %v2442 = vsel %vm2410, %v2281, -1e+30
        %v2443 = vsel %vm2411, %v2282, -1e+30
        %v2444 = vsel %vm2412, %v2283, -1e+30
        %v2445 = vsel %vm2413, %v2284, -1e+30
        %v2446 = vsel %vm2414, %v2285, -1e+30
        %v2447 = vsel %vm2415, %v2286, -1e+30
        %v2448 = vsel %vm2416, %v2287, -1e+30
        %v2449 = vsel %vm2417, %v2288, -1e+30
        %v2450 = vsel %vm2418, %v2289, -1e+30
        %v2451 = vsel %vm2419, %v2290, -1e+30
        %v2452 = vsel %vm2420, %v2291, -1e+30
        %v2453 = vsel %vm2421, %v2292, -1e+30
        %v2454 = vsel %vm2422, %v2293, -1e+30
        %v2455 = vsel %vm2423, %v2294, -1e+30
        %v2456 = vmax.f32 %v2424, %v2425
        %2457 = vmax.xlane.f32.xlu0 %v2456
        %v2458 = vpop.xlane.xlu0 %2457
        %v2459 = vmax.f32 %v2426, %v2427
        %2460 = vmax.xlane.f32.xlu0 %v2459
        %v2461 = vpop.xlane.xlu0 %2460
        %v2462 = vmax.f32 %v2428, %v2429
        %2463 = vmax.xlane.f32.xlu0 %v2462
        %v2464 = vpop.xlane.xlu0 %2463
        %v2465 = vmax.f32 %v2430, %v2431
        %2466 = vmax.xlane.f32.xlu0 %v2465
        %v2467 = vpop.xlane.xlu0 %2466
        %v2468 = vmax.f32 %v2432, %v2433
        %2469 = vmax.xlane.f32.xlu0 %v2468
        %v2470 = vpop.xlane.xlu0 %2469
        %v2471 = vmax.f32 %v2434, %v2435
        %2472 = vmax.xlane.f32.xlu0 %v2471
        %v2473 = vpop.xlane.xlu0 %2472
        %v2474 = vmax.f32 %v2436, %v2437
        %2475 = vmax.xlane.f32.xlu0 %v2474
        %v2476 = vpop.xlane.xlu0 %2475
        %v2477 = vmax.f32 %v2438, %v2439
        %2478 = vmax.xlane.f32.xlu0 %v2477
        %v2479 = vpop.xlane.xlu0 %2478
        %v2480 = vmax.f32 %v2440, %v2441
        %2481 = vmax.xlane.f32.xlu0 %v2480
        %v2482 = vpop.xlane.xlu0 %2481
        %v2483 = vmax.f32 %v2442, %v2443
        %2484 = vmax.xlane.f32.xlu0 %v2483
        %v2485 = vpop.xlane.xlu0 %2484
        %v2486 = vmax.f32 %v2444, %v2445
        %2487 = vmax.xlane.f32.xlu0 %v2486
        %v2488 = vpop.xlane.xlu0 %2487
        %v2489 = vmax.f32 %v2446, %v2447
        %2490 = vmax.xlane.f32.xlu0 %v2489
        %v2491 = vpop.xlane.xlu0 %2490
        %v2492 = vmax.f32 %v2448, %v2449
        %2493 = vmax.xlane.f32.xlu0 %v2492
        %v2494 = vpop.xlane.xlu0 %2493
        %v2495 = vmax.f32 %v2450, %v2451
        %2496 = vmax.xlane.f32.xlu0 %v2495
        %v2497 = vpop.xlane.xlu0 %2496
        %v2498 = vmax.f32 %v2452, %v2453
        %2499 = vmax.xlane.f32.xlu0 %v2498
        %v2500 = vpop.xlane.xlu0 %2499
        %v2501 = vmax.f32 %v2454, %v2455
        %2502 = vmax.xlane.f32.xlu0 %v2501
        %v2503 = vpop.xlane.xlu0 %2502
        %v2504 = vsub.f32 %v2424, %v2458
        %v2505 = vsub.f32 %v2425, %v2458
        %v2506 = vsub.f32 %v2426, %v2461
        %v2507 = vsub.f32 %v2427, %v2461
        %v2508 = vsub.f32 %v2428, %v2464
        %v2509 = vsub.f32 %v2429, %v2464
        %v2510 = vsub.f32 %v2430, %v2467
        %v2511 = vsub.f32 %v2431, %v2467
        %v2512 = vsub.f32 %v2432, %v2470
        %v2513 = vsub.f32 %v2433, %v2470
        %v2514 = vsub.f32 %v2434, %v2473
        %v2515 = vsub.f32 %v2435, %v2473
        %v2516 = vsub.f32 %v2436, %v2476
        %v2517 = vsub.f32 %v2437, %v2476
        %v2518 = vsub.f32 %v2438, %v2479
        %v2519 = vsub.f32 %v2439, %v2479
        %v2520 = vsub.f32 %v2440, %v2482
        %v2521 = vsub.f32 %v2441, %v2482
        %v2522 = vsub.f32 %v2442, %v2485
        %v2523 = vsub.f32 %v2443, %v2485
        %v2524 = vsub.f32 %v2444, %v2488
        %v2525 = vsub.f32 %v2445, %v2488
        %v2526 = vsub.f32 %v2446, %v2491
        %v2527 = vsub.f32 %v2447, %v2491
        %v2528 = vsub.f32 %v2448, %v2494
        %v2529 = vsub.f32 %v2449, %v2494
        %v2530 = vsub.f32 %v2450, %v2497
        %v2531 = vsub.f32 %v2451, %v2497
        %v2532 = vsub.f32 %v2452, %v2500
        %v2533 = vsub.f32 %v2453, %v2500
        %v2534 = vsub.f32 %v2454, %v2503
        %v2535 = vsub.f32 %v2455, %v2503
        %v2536 = vmul.f32 %v2504, 1.442695
        %v2537 = vpow.pop %v2536
        %v2538 = vmul.f32 %v2505, 1.442695
        %v2539 = vpow.pop %v2538
        %v2540 = vmul.f32 %v2506, 1.442695
        %v2541 = vpow.pop %v2540
        %v2542 = vmul.f32 %v2507, 1.442695
        %v2543 = vpow.pop %v2542
        %v2544 = vmul.f32 %v2508, 1.442695
        %v2545 = vpow.pop %v2544
        %v2546 = vmul.f32 %v2509, 1.442695
        %v2547 = vpow.pop %v2546
        %v2548 = vmul.f32 %v2510, 1.442695
        %v2549 = vpow.pop %v2548
        %v2550 = vmul.f32 %v2511, 1.442695
        %v2551 = vpow.pop %v2550
        %v2552 = vmul.f32 %v2512, 1.442695
        %v2553 = vpow.pop %v2552
        %v2554 = vmul.f32 %v2513, 1.442695
        %v2555 = vpow.pop %v2554
        %v2556 = vmul.f32 %v2514, 1.442695
        %v2557 = vpow.pop %v2556
        %v2558 = vmul.f32 %v2515, 1.442695
        %v2559 = vpow.pop %v2558
        %v2560 = vmul.f32 %v2516, 1.442695
        %v2561 = vpow.pop %v2560
        %v2562 = vmul.f32 %v2517, 1.442695
        %v2563 = vpow.pop %v2562
        %v2564 = vmul.f32 %v2518, 1.442695
        %v2565 = vpow.pop %v2564
        %v2566 = vmul.f32 %v2519, 1.442695
        %v2567 = vpow.pop %v2566
        %v2568 = vmul.f32 %v2520, 1.442695
        %v2569 = vpow.pop %v2568
        %v2570 = vmul.f32 %v2521, 1.442695
        %v2571 = vpow.pop %v2570
        %v2572 = vmul.f32 %v2522, 1.442695
        %v2573 = vpow.pop %v2572
        %v2574 = vmul.f32 %v2523, 1.442695
        %v2575 = vpow.pop %v2574
        %v2576 = vmul.f32 %v2524, 1.442695
        %v2577 = vpow.pop %v2576
        %v2578 = vmul.f32 %v2525, 1.442695
        %v2579 = vpow.pop %v2578
        %v2580 = vmul.f32 %v2526, 1.442695
        %v2581 = vpow.pop %v2580
        %v2582 = vmul.f32 %v2527, 1.442695
        %v2583 = vpow.pop %v2582
        %v2584 = vmul.f32 %v2528, 1.442695
        %v2585 = vpow.pop %v2584
        %v2586 = vmul.f32 %v2529, 1.442695
        %v2587 = vpow.pop %v2586
        %v2588 = vmul.f32 %v2530, 1.442695
        %v2589 = vpow.pop %v2588
        %v2590 = vmul.f32 %v2531, 1.442695
        %v2591 = vpow.pop %v2590
        %v2592 = vmul.f32 %v2532, 1.442695
        %v2593 = vpow.pop %v2592
        %v2594 = vmul.f32 %v2533, 1.442695
        %v2595 = vpow.pop %v2594
        %v2596 = vmul.f32 %v2534, 1.442695
        %v2597 = vpow.pop %v2596
        %v2598 = vmul.f32 %v2535, 1.442695
        %v2599 = vpow.pop %v2598
        %v2600 = vadd.f32 %v2537, %v2539
        %2601 = vadd.xlane.f32.xlu0 %v2600
        %v2602 = vpop.xlane.xlu0 %2601
        %v2603 = vadd.f32 %v2541, %v2543
        %2604 = vadd.xlane.f32.xlu0 %v2603
        %v2605 = vpop.xlane.xlu0 %2604
        %v2606 = vadd.f32 %v2545, %v2547
        %2607 = vadd.xlane.f32.xlu0 %v2606
        %v2608 = vpop.xlane.xlu0 %2607
        %v2609 = vadd.f32 %v2549, %v2551
        %2610 = vadd.xlane.f32.xlu0 %v2609
        %v2611 = vpop.xlane.xlu0 %2610
        %v2612 = vadd.f32 %v2553, %v2555
        %2613 = vadd.xlane.f32.xlu0 %v2612
        %v2614 = vpop.xlane.xlu0 %2613
        %v2615 = vadd.f32 %v2557, %v2559
        %2616 = vadd.xlane.f32.xlu0 %v2615
        %v2617 = vpop.xlane.xlu0 %2616
        %v2618 = vadd.f32 %v2561, %v2563
        %2619 = vadd.xlane.f32.xlu0 %v2618
        %v2620 = vpop.xlane.xlu0 %2619
        %v2621 = vadd.f32 %v2565, %v2567
        %2622 = vadd.xlane.f32.xlu0 %v2621
        %v2623 = vpop.xlane.xlu0 %2622
        %v2624 = vadd.f32 %v2569, %v2571
        %2625 = vadd.xlane.f32.xlu0 %v2624
        %v2626 = vpop.xlane.xlu0 %2625
        %v2627 = vadd.f32 %v2573, %v2575
        %2628 = vadd.xlane.f32.xlu0 %v2627
        %v2629 = vpop.xlane.xlu0 %2628
        %v2630 = vadd.f32 %v2577, %v2579
        %2631 = vadd.xlane.f32.xlu0 %v2630
        %v2632 = vpop.xlane.xlu0 %2631
        %v2633 = vadd.f32 %v2581, %v2583
        %2634 = vadd.xlane.f32.xlu0 %v2633
        %v2635 = vpop.xlane.xlu0 %2634
        %v2636 = vadd.f32 %v2585, %v2587
        %2637 = vadd.xlane.f32.xlu0 %v2636
        %v2638 = vpop.xlane.xlu0 %2637
        %v2639 = vadd.f32 %v2589, %v2591
        %2640 = vadd.xlane.f32.xlu0 %v2639
        %v2641 = vpop.xlane.xlu0 %2640
        %v2642 = vadd.f32 %v2593, %v2595
        %2643 = vadd.xlane.f32.xlu0 %v2642
        %v2644 = vpop.xlane.xlu0 %2643
        %v2645 = vadd.f32 %v2597, %v2599
        %2646 = vadd.xlane.f32.xlu0 %v2645
        %v2647 = vpop.xlane.xlu0 %2646
        %v2648 = vpack.c.bf16 %v2541, %v2537
        %v2649 = vpack.c.bf16 %v2543, %v2539
        %v2650 = vpack.c.bf16 %v2549, %v2545
        %v2651 = vpack.c.bf16 %v2551, %v2547
        %v2652 = vpack.c.bf16 %v2557, %v2553
        %v2653 = vpack.c.bf16 %v2559, %v2555
        %v2654 = vpack.c.bf16 %v2565, %v2561
        %v2655 = vpack.c.bf16 %v2567, %v2563
        %v2656 = vpack.c.bf16 %v2573, %v2569
        %v2657 = vpack.c.bf16 %v2575, %v2571
        %v2658 = vpack.c.bf16 %v2581, %v2577
        %v2659 = vpack.c.bf16 %v2583, %v2579
        %v2660 = vpack.c.bf16 %v2589, %v2585
        %v2661 = vpack.c.bf16 %v2591, %v2587
        %v2662 = vpack.c.bf16 %v2597, %v2593
        %v2663 = vpack.c.bf16 %v2599, %v2595
        %v2696 = vunpack.c.l.b16 %v377
        %v2697 = vunpack.c.l.b16 %v378
        %v2698 = vunpack.c.l.b16 %v379
        %v2699 = vunpack.c.l.b16 %v380
        %v2700 = vunpack.c.l.b16 %v381
        %v2701 = vunpack.c.l.b16 %v382
        %v2702 = vunpack.c.l.b16 %v383
        %v2703 = vunpack.c.l.b16 %v384
        %v2704 = vunpack.c.l.b16 %v385
        %v2705 = vunpack.c.l.b16 %v386
        %v2706 = vunpack.c.l.b16 %v387
        %v2707 = vunpack.c.l.b16 %v388
        %v2708 = vunpack.c.l.b16 %v389
        %v2709 = vunpack.c.l.b16 %v390
        %v2710 = vunpack.c.l.b16 %v391
        %v2711 = vunpack.c.l.b16 %v392
        %v2712 = vunpack.c.l.b16 %v393
        %v2713 = vunpack.c.l.b16 %v394
        %v2714 = vunpack.c.l.b16 %v395
        %v2715 = vunpack.c.l.b16 %v396
        %v2716 = vunpack.c.l.b16 %v397
        %v2717 = vunpack.c.l.b16 %v398
        %v2718 = vunpack.c.l.b16 %v399
        %v2719 = vunpack.c.l.b16 %v400
        %v2720 = vunpack.c.l.b16 %v401
        %v2721 = vunpack.c.l.b16 %v402
        %v2722 = vunpack.c.l.b16 %v403
        %v2723 = vunpack.c.l.b16 %v404
        %v2724 = vunpack.c.l.b16 %v405
        %v2725 = vunpack.c.l.b16 %v406
        %v2726 = vunpack.c.l.b16 %v407
        %v2727 = vunpack.c.l.b16 %v408
        %v2728 = vpack.c.b16 %v2697, %v2696
        %v2729 = vpack.c.b16 %v2699, %v2698
        %v2730 = vpack.c.b16 %v2701, %v2700
        %v2731 = vpack.c.b16 %v2703, %v2702
        %v2732 = vpack.c.b16 %v2705, %v2704
        %v2733 = vpack.c.b16 %v2707, %v2706
        %v2734 = vpack.c.b16 %v2709, %v2708
        %v2735 = vpack.c.b16 %v2711, %v2710
        %v2736 = vpack.c.b16 %v2713, %v2712
        %v2737 = vpack.c.b16 %v2715, %v2714
        %v2738 = vpack.c.b16 %v2717, %v2716
        %v2739 = vpack.c.b16 %v2719, %v2718
        %v2740 = vpack.c.b16 %v2721, %v2720
        %v2741 = vpack.c.b16 %v2723, %v2722
        %v2742 = vpack.c.b16 %v2725, %v2724
        %v2743 = vpack.c.b16 %v2727, %v2726
        %2760 = vmatprep.subr.bf16.mxu0 0
        %2761 = vmatpush1.bf16.msra.mxu0 %v2728
        %2762 = vmatprep.subr.bf16.mxu0 0
        %2763 = vmatpush1.bf16.msra.mxu0 %v2729
        %2764 = vmatprep.subr.bf16.mxu0 0
        %2765 = vmatpush1.bf16.msra.mxu0 %v2730
        %2766 = vmatprep.subr.bf16.mxu0 0
        %2767 = vmatpush1.bf16.msra.mxu0 %v2731
        %2768 = vmatprep.subr.bf16.mxu0 0
        %2769 = vmatpush1.bf16.msra.mxu0 %v2732
        %2770 = vmatprep.subr.bf16.mxu0 0
        %2771 = vmatpush1.bf16.msra.mxu0 %v2733
        %2772 = vmatprep.subr.bf16.mxu0 0
        %2773 = vmatpush1.bf16.msra.mxu0 %v2734
        %2774 = vmatprep.subr.bf16.mxu0 0
        %2775 = vmatpush1.bf16.msra.mxu0 %v2735
        %2776 = vmatprep.subr.bf16.mxu0 0
        %2777 = vmatpush1.bf16.msra.mxu0 %v2736
        %2778 = vmatprep.subr.bf16.mxu0 0
        %2779 = vmatpush1.bf16.msra.mxu0 %v2737
        %2780 = vmatprep.subr.bf16.mxu0 0
        %2781 = vmatpush1.bf16.msra.mxu0 %v2738
        %2782 = vmatprep.subr.bf16.mxu0 0
        %2783 = vmatpush1.bf16.msra.mxu0 %v2739
        %2784 = vmatprep.subr.bf16.mxu0 0
        %2785 = vmatpush1.bf16.msra.mxu0 %v2740
        %2786 = vmatprep.subr.bf16.mxu0 0
        %2787 = vmatpush1.bf16.msra.mxu0 %v2741
        %2788 = vmatprep.subr.bf16.mxu0 0
        %2789 = vmatpush1.bf16.msra.mxu0 %v2742
        %2790 = vmatprep.subr.bf16.mxu0 0
        %2791 = vmatpush1.bf16.msra.mxu0 %v2743
        %2792 = vmatprep.mubr.bf16.mxu0 %v2649
        %2793 = vmatmul.mubr.bf16.gmra.mrb[0].mxu0 %v2648
        %v2794 = vpop.f32.mrb[0].mxu0
        %v2795 = vadd.f32 0.0, %v2794
        %v2796 = vpop.f32.mrb[0].mxu0
        %v2797 = vpop.f32.mrb[0].mxu0
        %v2798 = vadd.f32 0.0, %v2797
        %v2799 = vpop.f32.mrb[0].mxu0
        %2800 = vmatprep.mubr.bf16.mxu0 %v2651
        %2801 = vmatmul.mubr.bf16.gmra.mrb[0].mxu0 %v2650
        %v2802 = vpop.f32.mrb[0].mxu0
        %v2803 = vadd.f32 0.0, %v2802
        %v2804 = vpop.f32.mrb[0].mxu0
        %v2805 = vpop.f32.mrb[0].mxu0
        %v2806 = vadd.f32 0.0, %v2805
        %v2807 = vpop.f32.mrb[0].mxu0
        %2808 = vmatprep.mubr.bf16.mxu0 %v2653
        %2809 = vmatmul.mubr.bf16.gmra.mrb[0].mxu0 %v2652
        %v2810 = vpop.f32.mrb[0].mxu0
        %v2811 = vadd.f32 0.0, %v2810
        %v2812 = vpop.f32.mrb[0].mxu0
        %v2813 = vpop.f32.mrb[0].mxu0
        %v2814 = vadd.f32 0.0, %v2813
        %v2815 = vpop.f32.mrb[0].mxu0
        %2816 = vmatprep.mubr.bf16.mxu0 %v2655
        %2817 = vmatmul.mubr.bf16.gmra.mrb[0].mxu0 %v2654
        %v2818 = vpop.f32.mrb[0].mxu0
        %v2819 = vadd.f32 0.0, %v2818
        %v2820 = vpop.f32.mrb[0].mxu0
        %v2821 = vpop.f32.mrb[0].mxu0
        %v2822 = vadd.f32 0.0, %v2821
        %v2823 = vpop.f32.mrb[0].mxu0
        %2824 = vmatprep.mubr.bf16.mxu0 %v2657
        %2825 = vmatmul.mubr.bf16.gmra.mrb[0].mxu0 %v2656
        %v2826 = vpop.f32.mrb[0].mxu0
        %v2827 = vadd.f32 0.0, %v2826
        %v2828 = vpop.f32.mrb[0].mxu0
        %v2829 = vpop.f32.mrb[0].mxu0
        %v2830 = vadd.f32 0.0, %v2829
        %v2831 = vpop.f32.mrb[0].mxu0
        %2832 = vmatprep.mubr.bf16.mxu0 %v2659
        %2833 = vmatmul.mubr.bf16.gmra.mrb[0].mxu0 %v2658
        %v2834 = vpop.f32.mrb[0].mxu0
        %v2835 = vadd.f32 0.0, %v2834
        %v2836 = vpop.f32.mrb[0].mxu0
        %v2837 = vpop.f32.mrb[0].mxu0
        %v2838 = vadd.f32 0.0, %v2837
        %v2839 = vpop.f32.mrb[0].mxu0
        %2840 = vmatprep.mubr.bf16.mxu0 %v2661
        %2841 = vmatmul.mubr.bf16.gmra.mrb[0].mxu0 %v2660
        %v2842 = vpop.f32.mrb[0].mxu0
        %v2843 = vadd.f32 0.0, %v2842
        %v2844 = vpop.f32.mrb[0].mxu0
        %v2845 = vpop.f32.mrb[0].mxu0
        %v2846 = vadd.f32 0.0, %v2845
        %v2847 = vpop.f32.mrb[0].mxu0
        %2848 = vmatprep.mubr.bf16.mxu0 %v2663
        %2849 = vmatmul.mubr.bf16.gmra.mrb[0].mxu0 %v2662
        %v2850 = vpop.f32.mrb[0].mxu0
        %v2851 = vadd.f32 0.0, %v2850
        %v2852 = vpop.f32.mrb[0].mxu0
        %v2853 = vpop.f32.mrb[0].mxu0
        %v2854 = vadd.f32 0.0, %v2853
        %v2855 = vpop.f32.mrb[0].mxu0
        %2856 = vdwg.mxu0
        %v2857 = vrcp.pop %v2602
        %v2858 = vrcp.pop %v2605
        %v2859 = vrcp.pop %v2608
        %v2860 = vrcp.pop %v2611
        %v2861 = vrcp.pop %v2614
        %v2862 = vrcp.pop %v2617
        %v2863 = vrcp.pop %v2620
        %v2864 = vrcp.pop %v2623
        %v2865 = vrcp.pop %v2626
        %v2866 = vrcp.pop %v2629
        %v2867 = vrcp.pop %v2632
        %v2868 = vrcp.pop %v2635
        %v2869 = vrcp.pop %v2638
        %v2870 = vrcp.pop %v2641
        %v2871 = vrcp.pop %v2644
        %v2872 = vrcp.pop %v2647
        %v2873 = vmul.f32 %v2795, %v2857
        %v2874 = vmul.f32 %v2798, %v2858
        %v2875 = vmul.f32 %v2803, %v2859
        %v2876 = vmul.f32 %v2806, %v2860
        %v2877 = vmul.f32 %v2811, %v2861
        %v2878 = vmul.f32 %v2814, %v2862
        %v2879 = vmul.f32 %v2819, %v2863
        %v2880 = vmul.f32 %v2822, %v2864
        %v2881 = vmul.f32 %v2827, %v2865
        %v2882 = vmul.f32 %v2830, %v2866
        %v2883 = vmul.f32 %v2835, %v2867
        %v2884 = vmul.f32 %v2838, %v2868
        %v2885 = vmul.f32 %v2843, %v2869
        %v2886 = vmul.f32 %v2846, %v2870
        %v2887 = vmul.f32 %v2851, %v2871
        %v2888 = vmul.f32 %v2854, %v2872
        %v2889 = vpack.c.bf16 %v2874, %v2873
        %v2890 = vpack.c.bf16 %v2876, %v2875
        %v2891 = vpack.c.bf16 %v2878, %v2877
        %v2892 = vpack.c.bf16 %v2880, %v2879
        %v2893 = vpack.c.bf16 %v2882, %v2881
        %v2894 = vpack.c.bf16 %v2884, %v2883
        %v2895 = vpack.c.bf16 %v2886, %v2885
        %v2896 = vpack.c.bf16 %v2888, %v2887
        %v2905 = vunpack.c.l.b16 %v2889
        %v2906 = vunpack.c.h.b16 %v2889
        %v2907 = vunpack.c.l.b16 %v2890
        %v2908 = vunpack.c.h.b16 %v2890
        %v2909 = vunpack.c.l.b16 %v2891
        %v2910 = vunpack.c.h.b16 %v2891
        %v2911 = vunpack.c.l.b16 %v2892
        %v2912 = vunpack.c.h.b16 %v2892
        %v2913 = vunpack.c.l.b16 %v2893
        %v2914 = vunpack.c.h.b16 %v2893
        %v2915 = vunpack.c.l.b16 %v2894
        %v2916 = vunpack.c.h.b16 %v2894
        %v2917 = vunpack.c.l.b16 %v2895
        %v2918 = vunpack.c.h.b16 %v2895
        %v2919 = vunpack.c.l.b16 %v2896
        %v2920 = vunpack.c.h.b16 %v2896
        %v2921 = vpack.c.b16 %v2905, %v2905
        %v2922 = vpack.c.b16 %v2906, %v2906
        %v2923 = vpack.c.b16 %v2907, %v2907
        %v2924 = vpack.c.b16 %v2908, %v2908
        %v2925 = vpack.c.b16 %v2909, %v2909
        %v2926 = vpack.c.b16 %v2910, %v2910
        %v2927 = vpack.c.b16 %v2911, %v2911
        %v2928 = vpack.c.b16 %v2912, %v2912
        %v2929 = vpack.c.b16 %v2913, %v2913
        %v2930 = vpack.c.b16 %v2914, %v2914
        %v2931 = vpack.c.b16 %v2915, %v2915
        %v2932 = vpack.c.b16 %v2916, %v2916
        %v2933 = vpack.c.b16 %v2917, %v2917
        %v2934 = vpack.c.b16 %v2918, %v2918
        %v2935 = vpack.c.b16 %v2919, %v2919
        %v2936 = vpack.c.b16 %v2920, %v2920
        %2953 = vst [vmem:[%s325] sm:$0xf] %v2921
        %2954 = vst [vmem:[%s325 + $0x4] sm:$0xf] %v2922
        %2955 = vst [vmem:[%s325 + $0x8] sm:$0xf] %v2923
        %2956 = vst [vmem:[%s325 + $0xc] sm:$0xf] %v2924
        %2957 = vst [vmem:[%s325 + $0x10] sm:$0xf] %v2925
        %2958 = vst [vmem:[%s325 + $0x14] sm:$0xf] %v2926
        %2959 = vst [vmem:[%s325 + $0x18] sm:$0xf] %v2927
        %2960 = vst [vmem:[%s325 + $0x1c] sm:$0xf] %v2928
        %2961 = vst [vmem:[%s325 + $0x20] sm:$0xf] %v2929
        %2962 = vst [vmem:[%s325 + $0x24] sm:$0xf] %v2930
        %2963 = vst [vmem:[%s325 + $0x28] sm:$0xf] %v2931
        %2964 = vst [vmem:[%s325 + $0x2c] sm:$0xf] %v2932
        %2965 = vst [vmem:[%s325 + $0x30] sm:$0xf] %v2933
        %2966 = vst [vmem:[%s325 + $0x34] sm:$0xf] %v2934
        %2967 = vst [vmem:[%s325 + $0x38] sm:$0xf] %v2935
        %2968 = vst [vmem:[%s325 + $0x3c] sm:$0xf] %v2936
        %s2969 = sand.u32 %s148, 1
        %s2970 = scalar_lea.sflag [#allocation4], %s2969
        %s2971 = sand.u32 %s148, 1
        %s2972 = smul.addr %s2971, 64
        %s2973 = scalar_lea.vmem [#allocation10], %s2972
        // Predicated region
        $region53: #{tpu_custom_call.1} parent=35 // pred_check
          %p2974 = pneg %p158
        $region54: #{tpu_custom_call.1} parent=35 // pred_check_branch
          %2976 = sbr.rel (%p2974) target = $region56
        $region55: #{tpu_custom_call.1} parent=35 // pred_region
          %s2977 = smul.u32 16, %s30
          %s2979 = ssub.s32 1024, 1024
          %2980 = vsyncadd %s2970, %s2979
          %s2981 = smul.addr %s29, 16
          %s2982 = sadd.s32 %s2977, %s2981
          %s2983 = smul.addr %s2982, 64
          %s2984 = scalar_lea.hbm %s4, %s2983
          %s2985 = sshll.u32 %s2973, 4
          %s2986 = int_to_ptr.vmem [resolvable:$true] %s2985
          %2991 = dma.vmem_to_hbm [thread:$0]  %s2986, 1024, %s2984, %s2970, 64, 64, 4
        $region56: #{tpu_custom_call.1} parent=35 // pred_fallthru
          _
      $region36: #{tpu_custom_call.1} parent=5 // pred_fallthru
        _
      %p2992 = scmp.le.s32.totalorder 2, %s20
      // Predicated region
      $region57: #{tpu_custom_call.1} parent=5 // pred_check
        %p2993 = pneg %p2992
      $region58: #{tpu_custom_call.1} parent=5 // pred_check_branch
        %2995 = sbr.rel (%p2993) target = $region60
      $region59: #{tpu_custom_call.1} parent=5 // pred_region
        %s2996 = ssub.s32 %s20, 2
        // Predicated region
        $region61: #{tpu_custom_call.1} parent=59 // pred_check
          %p2997 = pneg %p164
        $region62: #{tpu_custom_call.1} parent=59 // pred_check_branch
          %2999 = sbr.rel (%p2997) target = $region64
        $region63: #{tpu_custom_call.1} parent=59 // pred_region
          %s3000 = sand.u32 %s149, 1
          %s3001 = scalar_lea.sflag [#allocation4], %s3000
          %s3002 = sand.u32 %s149, 1
          %s3003 = smul.addr %s3002, 64
          %s3004 = scalar_lea.vmem [#allocation10], %s3003
          %3005 = dma.done %s3001, 1024
        $region64: #{tpu_custom_call.1} parent=59 // pred_fallthru
          _
      $region60: #{tpu_custom_call.1} parent=5 // pred_fallthru
        _
    $region6: #{tpu_custom_call.1} parent=1 // loop_footer
      %s24 = sadd.s32 1, %s20
    $region7: #{tpu_custom_call.1} parent=1 // loop_footer_branch
      %19 = sbr.rel target = $region3
    $region8: #{tpu_custom_call.1} parent=1 // loop_exit
      _
    %3006 = vsyncpa [#allocation3], 1
    %s3007 = scalar_lea.sflag [#allocation3], 1
    %3008 = vsyncpa %s3007, 1
    %3009 = vsyncpa [#allocation6], 1
    %s3010 = scalar_lea.sflag [#allocation6], 1
    %3011 = vsyncpa %s3010, 1
    %3012 = vsyncpa [#allocation9], 1
    %3013 = vsyncpa [#allocation4], 1
    %s3014 = scalar_lea.sflag [#allocation4], 1
    %3015 = vsyncpa %s3014, 1

</llo_original>
